<compile_context>
chip_gen: v6e
topology: v6e:2x2x1
jax: 0.10.0
libtpu: 0.0.40
codegen_flags: <defaults>
</compile_context>

<pallas_src>
import jax
import jax.numpy as jnp
from jax import lax
from jax.experimental import pallas as pl
from jax.experimental.pallas import tpu as pltpu

KS = 5                 # Conv1d kernel_size
PAD = KS // 2 + 1      # = 3 (matches padding=ks//2+1)
BN_EPS = 1e-5


def extractor_kernel(x_ref, convbn_ref, lstm_ref, out_ref, col_ref):
    B, C_in = x_ref.shape                 # (args.batch, args.noise)
    KC = KS * C_in                        # flattened conv contraction dim
    H = convbn_ref.shape[1]               # latent_dim == LSTM hidden size
    L_out = B + 2 * PAD - KS + 1          # = B + 2

    x = x_ref[...]                        # (B, C_in), loaded once

    # ---- im2col of the zero-padded conv input (host transpose+pad folded in).
    # col[l, k*C_in + c] = x[l + k - PAD, c] if in range else 0.
    col_ref[...] = jnp.zeros_like(col_ref)
    for k in range(KS):                   # static taps -> static sub-block stores
        lo = max(0, PAD - k)
        hi = min(L_out, PAD - k + B)
        col_ref[lo:hi, k * C_in:(k + 1) * C_in] = x[lo + k - PAD:hi + k - PAD, :]
    cols = col_ref[...]                   # (L_out, KS*C_in)

    # ---- Conv1d (bias=False) as ONE MXU matmul (was 5 tiny matmuls).
    w_flat = convbn_ref[0:KC, :]          # (KS*C_in, C_out), row = k*C_in + c
    acc = jnp.dot(cols, w_flat, preferred_element_type=jnp.float32)  # (L_out, C_out)

    # ---- BatchNorm1d(track_running_stats=False): batch stats over (N=1, L).
    gamma = convbn_ref[KC:KC + 1, :]      # (1, C_out)
    beta = convbn_ref[KC + 1:KC + 2, :]
    mean = jnp.mean(acc, axis=0, keepdims=True)
    var = jnp.mean((acc - mean) ** 2, axis=0, keepdims=True)   # biased var
    bn = (acc - mean) * lax.rsqrt(var + BN_EPS) * gamma + beta

    # ---- Logish: x * log(1 + sigmoid(x)). Argument is in (1, 2), plain log
    # is numerically fine (log1p kept out to avoid any lowering risk).
    act = bn * jnp.log(1.0 + jax.nn.sigmoid(bn))

    # ---- AvgPool1d(kernel=B, stride=B, padding=1, count_include_pad=True).
    # Single window for B >= 5: [zero-pad, act rows 0..B-2], divided by B.
    gap = jnp.sum(act[0:B - 1, :], axis=0, keepdims=True) * (1.0 / B)   # (1, H)

    # ---- 2-layer LSTM (input_size=1, hidden=H), seq_len = H, batch = 1.
    # Packed parameter slab (rows x 4H):
    #   row 0        : W_ih_l0^T          (input_size = 1)
    #   row 1        : b_ih_l0 + b_hh_l0
    #   row 2        : b_ih_l1 + b_hh_l1
    #   rows 3..3+H  : W_hh_l0^T
    #   rows 3+H..   : [W_ih_l1^T ; W_hh_l1^T]  (stacked -> fused layer-1 matvec)
    wih0 = lstm_ref[0:1, :]
    b0 = lstm_ref[1:2, :]
    b1 = lstm_ref[2:3, :]
    whh0 = lstm_ref[3:3 + H, :]
    w1 = lstm_ref[3 + H:3 + 3 * H, :]

    def cell(z, c_prev):                  # PyTorch gate order: i, f, g, o
        s = jax.nn.sigmoid(z)             # one sigmoid on the full (1, 4H) vector
        g = jnp.tanh(z[:, 2 * H:3 * H])
        c_new = s[:, H:2 * H] * c_prev + s[:, 0:H] * g
        h_new = s[:, 3 * H:4 * H] * jnp.tanh(c_new)
        return h_new, c_new

    # TODO(synk): the PyTorch module persists h/c across forward calls
    # (self.h.data = h_end.data); this kernel reproduces a single forward
    # pass starting from the zero state (i.e. the first call).
    h0 = jnp.zeros((1, H), jnp.float32)
    c0 = jnp.zeros((1, H), jnp.float32)
    h1 = jnp.zeros((1, H), jnp.float32)
    c1 = jnp.zeros((1, H), jnp.float32)

    # Layer-0 input contributions depend only on `gap` -> hoisted off the
    # serial recurrence (loop below is statically unrolled, H steps).
    z0_in = [gap[0:1, t:t + 1] * wih0 + b0 for t in range(H)]

    # NOTE: evaluated replacing the (1,H)x(H,4H) matvecs with a VPU
    # broadcast-mul + sublane reduce; it needs a row<->column flip of h on the
    # critical path each step, so the MXU path is kept.
    for t in range(H):                    # seq_len = latent_dim (static, small)
        z0 = z0_in[t] + jnp.dot(h0, whh0, preferred_element_type=jnp.float32)
        h0, c0 = cell(z0, c0)
        z1 = jnp.dot(jnp.concatenate([h0, h1], axis=1), w1,
                     preferred_element_type=jnp.float32) + b1
        h1, c1 = cell(z1, c1)

    # ---- result = cat([x, y.repeat(B, 1)], dim=1), single store.
    out_ref[...] = jnp.concatenate([x, jnp.broadcast_to(h1, (B, H))], axis=1)


def init_params(key, noise, latent_dim, ks=KS):
    """Build the two packed parameter slabs (same statistics as the module)."""
    H = latent_dim
    k = jax.random.split(key, 9)

    # Conv1d weight (C_out, C_in, ks) ~ N(0, 0.01); flatten so that
    # w_flat[k*C_in + c, o] == w_pt[o, c, k].
    w_pt = 0.01 * jax.random.normal(k[0], (latent_dim, noise, ks), jnp.float32)
    w_flat = jnp.transpose(w_pt, (2, 1, 0)).reshape(ks * noise, latent_dim)
    gamma = jnp.ones((1, latent_dim), jnp.float32)       # BN affine defaults
    beta = jnp.zeros((1, latent_dim), jnp.float32)
    convbn = jnp.concatenate([w_flat, gamma, beta], axis=0)   # (ks*C_in + 2, C_out)

    s = 1.0 / (H ** 0.5)                                 # PyTorch LSTM init range
    u = lambda kk, shape: jax.random.uniform(kk, shape, jnp.float32, -s, s)
    wih0 = u(k[1], (1, 4 * H))                           # W_ih_l0^T (input_size=1)
    whh0 = u(k[2], (H, 4 * H))                           # W_hh_l0^T
    b0 = u(k[3], (1, 4 * H)) + u(k[4], (1, 4 * H))       # b_ih_l0 + b_hh_l0
    wih1 = u(k[5], (H, 4 * H))                           # W_ih_l1^T
    whh1 = u(k[6], (H, 4 * H))                           # W_hh_l1^T
    b1 = u(k[7], (1, 4 * H)) + u(k[8], (1, 4 * H))       # b_ih_l1 + b_hh_l1
    w1 = jnp.concatenate([wih1, whh1], axis=0)           # (2H, 4H)
    lstm = jnp.concatenate([wih0, b0, b1, whh0, w1], axis=0)  # (3 + 3H, 4H)

    return dict(convbn=convbn, lstm=lstm)


def extractor_forward(x, params):
    x = x.astype(jnp.float32)
    B, C_in = x.shape
    convbn = params["convbn"]
    lstm = params["lstm"]
    H = convbn.shape[1]
    assert convbn.shape[0] == KS * C_in + 2
    assert lstm.shape == (3 + 3 * H, 4 * H)
    # AvgPool1d(kernel=batch, stride=batch, padding=1) yields a single window
    # (and a valid input_size=1 LSTM input) only for batch >= 5.
    assert B >= 5, "Extractor kernel requires args.batch >= 5"

    vmem = pl.BlockSpec(memory_space=pltpu.MemorySpace.VMEM)
    # Single invocation, everything whole-array resident in VMEM (<20 KB);
    # no grid/tiling needed.  (If many independent inputs were batched, a
    # leading "parallel" grid axis would shard them across v7x's two cores.)
    return pl.pallas_call(
        extractor_kernel,
        out_shape=jax.ShapeDtypeStruct((B, C_in + H), jnp.float32),
        in_specs=[vmem, vmem, vmem],
        out_specs=vmem,
        scratch_shapes=[pltpu.VMEM((B + 2, KS * C_in), jnp.float32)],
    )(x, convbn, lstm)


if __name__ == "__main__":
    BATCH, NOISE, LATENT = 8, 4, 8      # args.batch, args.noise, latent_dim
    key = jax.random.PRNGKey(0)
    kx, kp = jax.random.split(key)
    x = jax.random.normal(kx, (BATCH, NOISE), jnp.float32)
    params = init_params(kp, NOISE, LATENT)

    out = extractor_forward(x, params)
    jax.block_until_ready(out)
    assert out.shape == (BATCH, NOISE + LATENT)
    assert bool(jnp.all(jnp.isfinite(out)))
    print("KERNEL_OK")
</pallas_src>

<mosaic_0001>
module attributes {stable_mosaic.version = 11 : i64} {
  func.func @extractor_kernel(%arg0: memref<8x4xf32, #tpu.memory_space<vmem>>, %arg1: memref<22x8xf32, #tpu.memory_space<vmem>>, %arg2: memref<27x32xf32, #tpu.memory_space<vmem>>, %arg3: memref<8x12xf32, #tpu.memory_space<vmem>>, %arg4: memref<10x20xf32, #tpu.memory_space<vmem>>) attributes {dimension_semantics = [], scalar_prefetch = 0 : i64, scratch_operands = 1 : i64, tpu.core_type = #tpu.core_type<tc>} {
    %c0 = arith.constant 0 : index
    %c0_0 = arith.constant 0 : index
    %0 = vector.load %arg0[%c0, %c0_0] : memref<8x4xf32, #tpu.memory_space<vmem>>, vector<8x4xf32>
    %cst = arith.constant 0.000000e+00 : f32
    %1 = vector.broadcast %cst : f32 to vector<10x20xf32>
    %c0_1 = arith.constant 0 : index
    %c0_2 = arith.constant 0 : index
    %2 = vector.load %arg4[%c0_1, %c0_2] : memref<10x20xf32, #tpu.memory_space<vmem>>, vector<10x20xf32>
    tpu.vector_store %arg4[%c0_1, %c0_2], %1 {strides = array<i32>} : memref<10x20xf32, #tpu.memory_space<vmem>>, vector<10x20xf32>,
    %3 = vector.extract_strided_slice %0 {offsets = [0, 0], sizes = [7, 4], strides = [1, 1]} : vector<8x4xf32> to vector<7x4xf32>
    %c3 = arith.constant 3 : index
    %c0_3 = arith.constant 0 : index
    %4 = vector.load %arg4[%c3, %c0_3] : memref<10x20xf32, #tpu.memory_space<vmem>>, vector<7x4xf32>
    tpu.vector_store %arg4[%c3, %c0_3], %3 {strides = array<i32>} : memref<10x20xf32, #tpu.memory_space<vmem>>, vector<7x4xf32>,
    %c2 = arith.constant 2 : index
    %c4 = arith.constant 4 : index
    %5 = vector.load %arg4[%c2, %c4] : memref<10x20xf32, #tpu.memory_space<vmem>>, vector<8x4xf32>
    tpu.vector_store %arg4[%c2, %c4], %0 {strides = array<i32>} : memref<10x20xf32, #tpu.memory_space<vmem>>, vector<8x4xf32>,
    %c1 = arith.constant 1 : index
    %c8 = arith.constant 8 : index
    %6 = vector.load %arg4[%c1, %c8] : memref<10x20xf32, #tpu.memory_space<vmem>>, vector<8x4xf32>
    tpu.vector_store %arg4[%c1, %c8], %0 {strides = array<i32>} : memref<10x20xf32, #tpu.memory_space<vmem>>, vector<8x4xf32>,
    %c0_4 = arith.constant 0 : index
    %c12 = arith.constant 12 : index
    %7 = vector.load %arg4[%c0_4, %c12] : memref<10x20xf32, #tpu.memory_space<vmem>>, vector<8x4xf32>
    tpu.vector_store %arg4[%c0_4, %c12], %0 {strides = array<i32>} : memref<10x20xf32, #tpu.memory_space<vmem>>, vector<8x4xf32>,
    %8 = vector.extract_strided_slice %0 {offsets = [1, 0], sizes = [7, 4], strides = [1, 1]} : vector<8x4xf32> to vector<7x4xf32>
    %c0_5 = arith.constant 0 : index
    %c16 = arith.constant 16 : index
    %9 = vector.load %arg4[%c0_5, %c16] : memref<10x20xf32, #tpu.memory_space<vmem>>, vector<7x4xf32>
    tpu.vector_store %arg4[%c0_5, %c16], %8 {strides = array<i32>} : memref<10x20xf32, #tpu.memory_space<vmem>>, vector<7x4xf32>,
    %c0_6 = arith.constant 0 : index
    %c0_7 = arith.constant 0 : index
    %10 = vector.load %arg4[%c0_6, %c0_7] : memref<10x20xf32, #tpu.memory_space<vmem>>, vector<10x20xf32>
    %c0_8 = arith.constant 0 : index
    %c0_9 = arith.constant 0 : index
    %11 = vector.load %arg1[%c0_8, %c0_9] : memref<22x8xf32, #tpu.memory_space<vmem>>, vector<20x8xf32>
    %cst_10 = arith.constant dense<0.000000e+00> : vector<10x8xf32>
    %12 = tpu.matmul %10, %11, %cst_10 {dimension_numbers = #tpu.dot_dimension_numbers<[1], [0], [0], [1], [0, 0, 1, 1], [], []>} : vector<10x20xf32>, vector<20x8xf32>, vector<10x8xf32> -> vector<10x8xf32>
    %c20 = arith.constant 20 : index
    %c0_11 = arith.constant 0 : index
    %13 = vector.load %arg1[%c20, %c0_11] : memref<22x8xf32, #tpu.memory_space<vmem>>, vector<1x8xf32>
    %c21 = arith.constant 21 : index
    %c0_12 = arith.constant 0 : index
    %14 = vector.load %arg1[%c21, %c0_12] : memref<22x8xf32, #tpu.memory_space<vmem>>, vector<1x8xf32>
    %cst_13 = arith.constant dense<0.000000e+00> : vector<8xf32>
    %15 = vector.multi_reduction <add>, %12, %cst_13 [0] : vector<10x8xf32> to vector<8xf32>
    %16 = vector.shape_cast %15 : vector<8xf32> to vector<1x8xf32>
    %cst_14 = arith.constant 1.000000e+01 : f32
    %17 = vector.broadcast %cst_14 : f32 to vector<1x8xf32>
    %18 = arith.divf %16, %17 : vector<1x8xf32>
    %19 = vector.broadcast %18 : vector<1x8xf32> to vector<10x8xf32>
    %20 = arith.subf %12, %19 : vector<10x8xf32>
    %21 = arith.mulf %20, %20 : vector<10x8xf32>
    %cst_15 = arith.constant dense<0.000000e+00> : vector<8xf32>
    %22 = vector.multi_reduction <add>, %21, %cst_15 [0] : vector<10x8xf32> to vector<8xf32>
    %23 = vector.shape_cast %22 : vector<8xf32> to vector<1x8xf32>
    %cst_16 = arith.constant 1.000000e+01 : f32
    %24 = vector.broadcast %cst_16 : f32 to vector<1x8xf32>
    %25 = arith.divf %23, %24 : vector<1x8xf32>
    %26 = vector.broadcast %18 : vector<1x8xf32> to vector<10x8xf32>
    %27 = arith.subf %12, %26 : vector<10x8xf32>
    %cst_17 = arith.constant 9.99999974E-6 : f32
    %28 = vector.broadcast %cst_17 : f32 to vector<1x8xf32>
    %29 = arith.addf %25, %28 : vector<1x8xf32>
    %30 = math.rsqrt %29 : vector<1x8xf32>
    %31 = vector.broadcast %30 : vector<1x8xf32> to vector<10x8xf32>
    %32 = arith.mulf %27, %31 : vector<10x8xf32>
    %33 = vector.broadcast %13 : vector<1x8xf32> to vector<10x8xf32>
    %34 = arith.mulf %32, %33 : vector<10x8xf32>
    %35 = vector.broadcast %14 : vector<1x8xf32> to vector<10x8xf32>
    %36 = arith.addf %34, %35 : vector<10x8xf32>
    %37 = arith.negf %36 : vector<10x8xf32>
    %38 = math.exp %37 : vector<10x8xf32>
    %cst_18 = arith.constant 1.000000e+00 : f32
    %39 = vector.broadcast %cst_18 : f32 to vector<10x8xf32>
    %40 = arith.addf %39, %38 : vector<10x8xf32>
    %41 = arith.divf %39, %40 : vector<10x8xf32>
    %cst_19 = arith.constant 1.000000e+00 : f32
    %42 = vector.broadcast %cst_19 : f32 to vector<10x8xf32>
    %43 = arith.addf %42, %41 : vector<10x8xf32>
    %44 = math.log %43 : vector<10x8xf32>
    %45 = arith.mulf %36, %44 : vector<10x8xf32>
    %46 = vector.extract_strided_slice %45 {offsets = [0, 0], sizes = [7, 8], strides = [1, 1]} : vector<10x8xf32> to vector<7x8xf32>
    %cst_20 = arith.constant dense<0.000000e+00> : vector<8xf32>
    %47 = vector.multi_reduction <add>, %46, %cst_20 [0] : vector<7x8xf32> to vector<8xf32>
    %48 = vector.shape_cast %47 : vector<8xf32> to vector<1x8xf32>
    %cst_21 = arith.constant 1.250000e-01 : f32
    %49 = vector.broadcast %cst_21 : f32 to vector<1x8xf32>
    %50 = arith.mulf %48, %49 : vector<1x8xf32>
    %c0_22 = arith.constant 0 : index
    %c0_23 = arith.constant 0 : index
    %51 = vector.load %arg2[%c0_22, %c0_23] : memref<27x32xf32, #tpu.memory_space<vmem>>, vector<1x32xf32>
    %c1_24 = arith.constant 1 : index
    %c0_25 = arith.constant 0 : index
    %52 = vector.load %arg2[%c1_24, %c0_25] : memref<27x32xf32, #tpu.memory_space<vmem>>, vector<1x32xf32>
    %c2_26 = arith.constant 2 : index
    %c0_27 = arith.constant 0 : index
    %53 = vector.load %arg2[%c2_26, %c0_27] : memref<27x32xf32, #tpu.memory_space<vmem>>, vector<1x32xf32>
    %c3_28 = arith.constant 3 : index
    %c0_29 = arith.constant 0 : index
    %54 = vector.load %arg2[%c3_28, %c0_29] : memref<27x32xf32, #tpu.memory_space<vmem>>, vector<8x32xf32>
    %c11 = arith.constant 11 : index
    %c0_30 = arith.constant 0 : index
    %55 = vector.load %arg2[%c11, %c0_30] : memref<27x32xf32, #tpu.memory_space<vmem>>, vector<16x32xf32>
    %cst_31 = arith.constant 0.000000e+00 : f32
    %56 = vector.broadcast %cst_31 : f32 to vector<1x8xf32>
    %cst_32 = arith.constant 0.000000e+00 : f32
    %57 = vector.broadcast %cst_32 : f32 to vector<1x8xf32>
    %cst_33 = arith.constant 0.000000e+00 : f32
    %58 = vector.broadcast %cst_33 : f32 to vector<1x8xf32>
    %cst_34 = arith.constant 0.000000e+00 : f32
    %59 = vector.broadcast %cst_34 : f32 to vector<1x8xf32>
    %60 = vector.extract_strided_slice %50 {offsets = [0, 0], sizes = [1, 1], strides = [1, 1]} : vector<1x8xf32> to vector<1x1xf32>
    %61 = vector.broadcast %60 : vector<1x1xf32> to vector<1x32xf32>
    %62 = arith.mulf %61, %51 : vector<1x32xf32>
    %63 = arith.addf %62, %52 : vector<1x32xf32>
    %64 = vector.extract_strided_slice %50 {offsets = [0, 1], sizes = [1, 1], strides = [1, 1]} : vector<1x8xf32> to vector<1x1xf32>
    %65 = vector.broadcast %64 : vector<1x1xf32> to vector<1x32xf32>
    %66 = arith.mulf %65, %51 : vector<1x32xf32>
    %67 = arith.addf %66, %52 : vector<1x32xf32>
    %68 = vector.extract_strided_slice %50 {offsets = [0, 2], sizes = [1, 1], strides = [1, 1]} : vector<1x8xf32> to vector<1x1xf32>
    %69 = vector.broadcast %68 : vector<1x1xf32> to vector<1x32xf32>
    %70 = arith.mulf %69, %51 : vector<1x32xf32>
    %71 = arith.addf %70, %52 : vector<1x32xf32>
    %72 = vector.extract_strided_slice %50 {offsets = [0, 3], sizes = [1, 1], strides = [1, 1]} : vector<1x8xf32> to vector<1x1xf32>
    %73 = vector.broadcast %72 : vector<1x1xf32> to vector<1x32xf32>
    %74 = arith.mulf %73, %51 : vector<1x32xf32>
    %75 = arith.addf %74, %52 : vector<1x32xf32>
    %76 = vector.extract_strided_slice %50 {offsets = [0, 4], sizes = [1, 1], strides = [1, 1]} : vector<1x8xf32> to vector<1x1xf32>
    %77 = vector.broadcast %76 : vector<1x1xf32> to vector<1x32xf32>
    %78 = arith.mulf %77, %51 : vector<1x32xf32>
    %79 = arith.addf %78, %52 : vector<1x32xf32>
    %80 = vector.extract_strided_slice %50 {offsets = [0, 5], sizes = [1, 1], strides = [1, 1]} : vector<1x8xf32> to vector<1x1xf32>
    %81 = vector.broadcast %80 : vector<1x1xf32> to vector<1x32xf32>
    %82 = arith.mulf %81, %51 : vector<1x32xf32>
    %83 = arith.addf %82, %52 : vector<1x32xf32>
    %84 = vector.extract_strided_slice %50 {offsets = [0, 6], sizes = [1, 1], strides = [1, 1]} : vector<1x8xf32> to vector<1x1xf32>
    %85 = vector.broadcast %84 : vector<1x1xf32> to vector<1x32xf32>
    %86 = arith.mulf %85, %51 : vector<1x32xf32>
    %87 = arith.addf %86, %52 : vector<1x32xf32>
    %88 = vector.extract_strided_slice %50 {offsets = [0, 7], sizes = [1, 1], strides = [1, 1]} : vector<1x8xf32> to vector<1x1xf32>
    %89 = vector.broadcast %88 : vector<1x1xf32> to vector<1x32xf32>
    %90 = arith.mulf %89, %51 : vector<1x32xf32>
    %91 = arith.addf %90, %52 : vector<1x32xf32>
    %cst_35 = arith.constant dense<0.000000e+00> : vector<1x32xf32>
    %92 = tpu.matmul %56, %54, %cst_35 {dimension_numbers = #tpu.dot_dimension_numbers<[1], [0], [0], [1], [0, 0, 1, 1], [], []>} : vector<1x8xf32>, vector<8x32xf32>, vector<1x32xf32> -> vector<1x32xf32>
    %93 = arith.addf %63, %92 : vector<1x32xf32>
    %94 = arith.negf %93 : vector<1x32xf32>
    %95 = math.exp %94 : vector<1x32xf32>
    %cst_36 = arith.constant 1.000000e+00 : f32
    %96 = vector.broadcast %cst_36 : f32 to vector<1x32xf32>
    %97 = arith.addf %96, %95 : vector<1x32xf32>
    %98 = arith.divf %96, %97 : vector<1x32xf32>
    %99 = vector.extract_strided_slice %93 {offsets = [0, 16], sizes = [1, 8], strides = [1, 1]} : vector<1x32xf32> to vector<1x8xf32>
    %100 = math.tanh %99 : vector<1x8xf32>
    %101 = vector.extract_strided_slice %98 {offsets = [0, 8], sizes = [1, 8], strides = [1, 1]} : vector<1x32xf32> to vector<1x8xf32>
    %102 = arith.mulf %101, %57 : vector<1x8xf32>
    %103 = vector.extract_strided_slice %98 {offsets = [0, 0], sizes = [1, 8], strides = [1, 1]} : vector<1x32xf32> to vector<1x8xf32>
    %104 = arith.mulf %103, %100 : vector<1x8xf32>
    %105 = arith.addf %102, %104 : vector<1x8xf32>
    %106 = vector.extract_strided_slice %98 {offsets = [0, 24], sizes = [1, 8], strides = [1, 1]} : vector<1x32xf32> to vector<1x8xf32>
    %107 = math.tanh %105 : vector<1x8xf32>
    %108 = arith.mulf %106, %107 : vector<1x8xf32>
    %109 = tpu.concatenate %108, %58 in 1 : vector<1x8xf32>, vector<1x8xf32> -> vector<1x16xf32>
    %cst_37 = arith.constant dense<0.000000e+00> : vector<1x32xf32>
    %110 = tpu.matmul %109, %55, %cst_37 {dimension_numbers = #tpu.dot_dimension_numbers<[1], [0], [0], [1], [0, 0, 1, 1], [], []>} : vector<1x16xf32>, vector<16x32xf32>, vector<1x32xf32> -> vector<1x32xf32>
    %111 = arith.addf %110, %53 : vector<1x32xf32>
    %112 = arith.negf %111 : vector<1x32xf32>
    %113 = math.exp %112 : vector<1x32xf32>
    %cst_38 = arith.constant 1.000000e+00 : f32
    %114 = vector.broadcast %cst_38 : f32 to vector<1x32xf32>
    %115 = arith.addf %114, %113 : vector<1x32xf32>
    %116 = arith.divf %114, %115 : vector<1x32xf32>
    %117 = vector.extract_strided_slice %111 {offsets = [0, 16], sizes = [1, 8], strides = [1, 1]} : vector<1x32xf32> to vector<1x8xf32>
    %118 = math.tanh %117 : vector<1x8xf32>
    %119 = vector.extract_strided_slice %116 {offsets = [0, 8], sizes = [1, 8], strides = [1, 1]} : vector<1x32xf32> to vector<1x8xf32>
    %120 = arith.mulf %119, %59 : vector<1x8xf32>
    %121 = vector.extract_strided_slice %116 {offsets = [0, 0], sizes = [1, 8], strides = [1, 1]} : vector<1x32xf32> to vector<1x8xf32>
    %122 = arith.mulf %121, %118 : vector<1x8xf32>
    %123 = arith.addf %120, %122 : vector<1x8xf32>
    %124 = vector.extract_strided_slice %116 {offsets = [0, 24], sizes = [1, 8], strides = [1, 1]} : vector<1x32xf32> to vector<1x8xf32>
    %125 = math.tanh %123 : vector<1x8xf32>
    %126 = arith.mulf %124, %125 : vector<1x8xf32>
    %cst_39 = arith.constant dense<0.000000e+00> : vector<1x32xf32>
    %127 = tpu.matmul %108, %54, %cst_39 {dimension_numbers = #tpu.dot_dimension_numbers<[1], [0], [0], [1], [0, 0, 1, 1], [], []>} : vector<1x8xf32>, vector<8x32xf32>, vector<1x32xf32> -> vector<1x32xf32>
    %128 = arith.addf %67, %127 : vector<1x32xf32>
    %129 = arith.negf %128 : vector<1x32xf32>
    %130 = math.exp %129 : vector<1x32xf32>
    %cst_40 = arith.constant 1.000000e+00 : f32
    %131 = vector.broadcast %cst_40 : f32 to vector<1x32xf32>
    %132 = arith.addf %131, %130 : vector<1x32xf32>
    %133 = arith.divf %131, %132 : vector<1x32xf32>
    %134 = vector.extract_strided_slice %128 {offsets = [0, 16], sizes = [1, 8], strides = [1, 1]} : vector<1x32xf32> to vector<1x8xf32>
    %135 = math.tanh %134 : vector<1x8xf32>
    %136 = vector.extract_strided_slice %133 {offsets = [0, 8], sizes = [1, 8], strides = [1, 1]} : vector<1x32xf32> to vector<1x8xf32>
    %137 = arith.mulf %136, %105 : vector<1x8xf32>
    %138 = vector.extract_strided_slice %133 {offsets = [0, 0], sizes = [1, 8], strides = [1, 1]} : vector<1x32xf32> to vector<1x8xf32>
    %139 = arith.mulf %138, %135 : vector<1x8xf32>
    %140 = arith.addf %137, %139 : vector<1x8xf32>
    %141 = vector.extract_strided_slice %133 {offsets = [0, 24], sizes = [1, 8], strides = [1, 1]} : vector<1x32xf32> to vector<1x8xf32>
    %142 = math.tanh %140 : vector<1x8xf32>
    %143 = arith.mulf %141, %142 : vector<1x8xf32>
    %144 = tpu.concatenate %143, %126 in 1 : vector<1x8xf32>, vector<1x8xf32> -> vector<1x16xf32>
    %cst_41 = arith.constant dense<0.000000e+00> : vector<1x32xf32>
    %145 = tpu.matmul %144, %55, %cst_41 {dimension_numbers = #tpu.dot_dimension_numbers<[1], [0], [0], [1], [0, 0, 1, 1], [], []>} : vector<1x16xf32>, vector<16x32xf32>, vector<1x32xf32> -> vector<1x32xf32>
    %146 = arith.addf %145, %53 : vector<1x32xf32>
    %147 = arith.negf %146 : vector<1x32xf32>
    %148 = math.exp %147 : vector<1x32xf32>
    %cst_42 = arith.constant 1.000000e+00 : f32
    %149 = vector.broadcast %cst_42 : f32 to vector<1x32xf32>
    %150 = arith.addf %149, %148 : vector<1x32xf32>
    %151 = arith.divf %149, %150 : vector<1x32xf32>
    %152 = vector.extract_strided_slice %146 {offsets = [0, 16], sizes = [1, 8], strides = [1, 1]} : vector<1x32xf32> to vector<1x8xf32>
    %153 = math.tanh %152 : vector<1x8xf32>
    %154 = vector.extract_strided_slice %151 {offsets = [0, 8], sizes = [1, 8], strides = [1, 1]} : vector<1x32xf32> to vector<1x8xf32>
    %155 = arith.mulf %154, %123 : vector<1x8xf32>
    %156 = vector.extract_strided_slice %151 {offsets = [0, 0], sizes = [1, 8], strides = [1, 1]} : vector<1x32xf32> to vector<1x8xf32>
    %157 = arith.mulf %156, %153 : vector<1x8xf32>
    %158 = arith.addf %155, %157 : vector<1x8xf32>
    %159 = vector.extract_strided_slice %151 {offsets = [0, 24], sizes = [1, 8], strides = [1, 1]} : vector<1x32xf32> to vector<1x8xf32>
    %160 = math.tanh %158 : vector<1x8xf32>
    %161 = arith.mulf %159, %160 : vector<1x8xf32>
    %cst_43 = arith.constant dense<0.000000e+00> : vector<1x32xf32>
    %162 = tpu.matmul %143, %54, %cst_43 {dimension_numbers = #tpu.dot_dimension_numbers<[1], [0], [0], [1], [0, 0, 1, 1], [], []>} : vector<1x8xf32>, vector<8x32xf32>, vector<1x32xf32> -> vector<1x32xf32>
    %163 = arith.addf %71, %162 : vector<1x32xf32>
    %164 = arith.negf %163 : vector<1x32xf32>
    %165 = math.exp %164 : vector<1x32xf32>
    %cst_44 = arith.constant 1.000000e+00 : f32
    %166 = vector.broadcast %cst_44 : f32 to vector<1x32xf32>
    %167 = arith.addf %166, %165 : vector<1x32xf32>
    %168 = arith.divf %166, %167 : vector<1x32xf32>
    %169 = vector.extract_strided_slice %163 {offsets = [0, 16], sizes = [1, 8], strides = [1, 1]} : vector<1x32xf32> to vector<1x8xf32>
    %170 = math.tanh %169 : vector<1x8xf32>
    %171 = vector.extract_strided_slice %168 {offsets = [0, 8], sizes = [1, 8], strides = [1, 1]} : vector<1x32xf32> to vector<1x8xf32>
    %172 = arith.mulf %171, %140 : vector<1x8xf32>
    %173 = vector.extract_strided_slice %168 {offsets = [0, 0], sizes = [1, 8], strides = [1, 1]} : vector<1x32xf32> to vector<1x8xf32>
    %174 = arith.mulf %173, %170 : vector<1x8xf32>
    %175 = arith.addf %172, %174 : vector<1x8xf32>
    %176 = vector.extract_strided_slice %168 {offsets = [0, 24], sizes = [1, 8], strides = [1, 1]} : vector<1x32xf32> to vector<1x8xf32>
    %177 = math.tanh %175 : vector<1x8xf32>
    %178 = arith.mulf %176, %177 : vector<1x8xf32>
    %179 = tpu.concatenate %178, %161 in 1 : vector<1x8xf32>, vector<1x8xf32> -> vector<1x16xf32>
    %cst_45 = arith.constant dense<0.000000e+00> : vector<1x32xf32>
    %180 = tpu.matmul %179, %55, %cst_45 {dimension_numbers = #tpu.dot_dimension_numbers<[1], [0], [0], [1], [0, 0, 1, 1], [], []>} : vector<1x16xf32>, vector<16x32xf32>, vector<1x32xf32> -> vector<1x32xf32>
    %181 = arith.addf %180, %53 : vector<1x32xf32>
    %182 = arith.negf %181 : vector<1x32xf32>
    %183 = math.exp %182 : vector<1x32xf32>
    %cst_46 = arith.constant 1.000000e+00 : f32
    %184 = vector.broadcast %cst_46 : f32 to vector<1x32xf32>
    %185 = arith.addf %184, %183 : vector<1x32xf32>
    %186 = arith.divf %184, %185 : vector<1x32xf32>
    %187 = vector.extract_strided_slice %181 {offsets = [0, 16], sizes = [1, 8], strides = [1, 1]} : vector<1x32xf32> to vector<1x8xf32>
    %188 = math.tanh %187 : vector<1x8xf32>
    %189 = vector.extract_strided_slice %186 {offsets = [0, 8], sizes = [1, 8], strides = [1, 1]} : vector<1x32xf32> to vector<1x8xf32>
    %190 = arith.mulf %189, %158 : vector<1x8xf32>
    %191 = vector.extract_strided_slice %186 {offsets = [0, 0], sizes = [1, 8], strides = [1, 1]} : vector<1x32xf32> to vector<1x8xf32>
    %192 = arith.mulf %191, %188 : vector<1x8xf32>
    %193 = arith.addf %190, %192 : vector<1x8xf32>
    %194 = vector.extract_strided_slice %186 {offsets = [0, 24], sizes = [1, 8], strides = [1, 1]} : vector<1x32xf32> to vector<1x8xf32>
    %195 = math.tanh %193 : vector<1x8xf32>
    %196 = arith.mulf %194, %195 : vector<1x8xf32>
    %cst_47 = arith.constant dense<0.000000e+00> : vector<1x32xf32>
    %197 = tpu.matmul %178, %54, %cst_47 {dimension_numbers = #tpu.dot_dimension_numbers<[1], [0], [0], [1], [0, 0, 1, 1], [], []>} : vector<1x8xf32>, vector<8x32xf32>, vector<1x32xf32> -> vector<1x32xf32>
    %198 = arith.addf %75, %197 : vector<1x32xf32>
    %199 = arith.negf %198 : vector<1x32xf32>
    %200 = math.exp %199 : vector<1x32xf32>
    %cst_48 = arith.constant 1.000000e+00 : f32
    %201 = vector.broadcast %cst_48 : f32 to vector<1x32xf32>
    %202 = arith.addf %201, %200 : vector<1x32xf32>
    %203 = arith.divf %201, %202 : vector<1x32xf32>
    %204 = vector.extract_strided_slice %198 {offsets = [0, 16], sizes = [1, 8], strides = [1, 1]} : vector<1x32xf32> to vector<1x8xf32>
    %205 = math.tanh %204 : vector<1x8xf32>
    %206 = vector.extract_strided_slice %203 {offsets = [0, 8], sizes = [1, 8], strides = [1, 1]} : vector<1x32xf32> to vector<1x8xf32>
    %207 = arith.mulf %206, %175 : vector<1x8xf32>
    %208 = vector.extract_strided_slice %203 {offsets = [0, 0], sizes = [1, 8], strides = [1, 1]} : vector<1x32xf32> to vector<1x8xf32>
    %209 = arith.mulf %208, %205 : vector<1x8xf32>
    %210 = arith.addf %207, %209 : vector<1x8xf32>
    %211 = vector.extract_strided_slice %203 {offsets = [0, 24], sizes = [1, 8], strides = [1, 1]} : vector<1x32xf32> to vector<1x8xf32>
    %212 = math.tanh %210 : vector<1x8xf32>
    %213 = arith.mulf %211, %212 : vector<1x8xf32>
    %214 = tpu.concatenate %213, %196 in 1 : vector<1x8xf32>, vector<1x8xf32> -> vector<1x16xf32>
    %cst_49 = arith.constant dense<0.000000e+00> : vector<1x32xf32>
    %215 = tpu.matmul %214, %55, %cst_49 {dimension_numbers = #tpu.dot_dimension_numbers<[1], [0], [0], [1], [0, 0, 1, 1], [], []>} : vector<1x16xf32>, vector<16x32xf32>, vector<1x32xf32> -> vector<1x32xf32>
    %216 = arith.addf %215, %53 : vector<1x32xf32>
    %217 = arith.negf %216 : vector<1x32xf32>
    %218 = math.exp %217 : vector<1x32xf32>
    %cst_50 = arith.constant 1.000000e+00 : f32
    %219 = vector.broadcast %cst_50 : f32 to vector<1x32xf32>
    %220 = arith.addf %219, %218 : vector<1x32xf32>
    %221 = arith.divf %219, %220 : vector<1x32xf32>
    %222 = vector.extract_strided_slice %216 {offsets = [0, 16], sizes = [1, 8], strides = [1, 1]} : vector<1x32xf32> to vector<1x8xf32>
    %223 = math.tanh %222 : vector<1x8xf32>
    %224 = vector.extract_strided_slice %221 {offsets = [0, 8], sizes = [1, 8], strides = [1, 1]} : vector<1x32xf32> to vector<1x8xf32>
    %225 = arith.mulf %224, %193 : vector<1x8xf32>
    %226 = vector.extract_strided_slice %221 {offsets = [0, 0], sizes = [1, 8], strides = [1, 1]} : vector<1x32xf32> to vector<1x8xf32>
    %227 = arith.mulf %226, %223 : vector<1x8xf32>
    %228 = arith.addf %225, %227 : vector<1x8xf32>
    %229 = vector.extract_strided_slice %221 {offsets = [0, 24], sizes = [1, 8], strides = [1, 1]} : vector<1x32xf32> to vector<1x8xf32>
    %230 = math.tanh %228 : vector<1x8xf32>
    %231 = arith.mulf %229, %230 : vector<1x8xf32>
    %cst_51 = arith.constant dense<0.000000e+00> : vector<1x32xf32>
    %232 = tpu.matmul %213, %54, %cst_51 {dimension_numbers = #tpu.dot_dimension_numbers<[1], [0], [0], [1], [0, 0, 1, 1], [], []>} : vector<1x8xf32>, vector<8x32xf32>, vector<1x32xf32> -> vector<1x32xf32>
    %233 = arith.addf %79, %232 : vector<1x32xf32>
    %234 = arith.negf %233 : vector<1x32xf32>
    %235 = math.exp %234 : vector<1x32xf32>
    %cst_52 = arith.constant 1.000000e+00 : f32
    %236 = vector.broadcast %cst_52 : f32 to vector<1x32xf32>
    %237 = arith.addf %236, %235 : vector<1x32xf32>
    %238 = arith.divf %236, %237 : vector<1x32xf32>
    %239 = vector.extract_strided_slice %233 {offsets = [0, 16], sizes = [1, 8], strides = [1, 1]} : vector<1x32xf32> to vector<1x8xf32>
    %240 = math.tanh %239 : vector<1x8xf32>
    %241 = vector.extract_strided_slice %238 {offsets = [0, 8], sizes = [1, 8], strides = [1, 1]} : vector<1x32xf32> to vector<1x8xf32>
    %242 = arith.mulf %241, %210 : vector<1x8xf32>
    %243 = vector.extract_strided_slice %238 {offsets = [0, 0], sizes = [1, 8], strides = [1, 1]} : vector<1x32xf32> to vector<1x8xf32>
    %244 = arith.mulf %243, %240 : vector<1x8xf32>
    %245 = arith.addf %242, %244 : vector<1x8xf32>
    %246 = vector.extract_strided_slice %238 {offsets = [0, 24], sizes = [1, 8], strides = [1, 1]} : vector<1x32xf32> to vector<1x8xf32>
    %247 = math.tanh %245 : vector<1x8xf32>
    %248 = arith.mulf %246, %247 : vector<1x8xf32>
    %249 = tpu.concatenate %248, %231 in 1 : vector<1x8xf32>, vector<1x8xf32> -> vector<1x16xf32>
    %cst_53 = arith.constant dense<0.000000e+00> : vector<1x32xf32>
    %250 = tpu.matmul %249, %55, %cst_53 {dimension_numbers = #tpu.dot_dimension_numbers<[1], [0], [0], [1], [0, 0, 1, 1], [], []>} : vector<1x16xf32>, vector<16x32xf32>, vector<1x32xf32> -> vector<1x32xf32>
    %251 = arith.addf %250, %53 : vector<1x32xf32>
    %252 = arith.negf %251 : vector<1x32xf32>
    %253 = math.exp %252 : vector<1x32xf32>
    %cst_54 = arith.constant 1.000000e+00 : f32
    %254 = vector.broadcast %cst_54 : f32 to vector<1x32xf32>
    %255 = arith.addf %254, %253 : vector<1x32xf32>
    %256 = arith.divf %254, %255 : vector<1x32xf32>
    %257 = vector.extract_strided_slice %251 {offsets = [0, 16], sizes = [1, 8], strides = [1, 1]} : vector<1x32xf32> to vector<1x8xf32>
    %258 = math.tanh %257 : vector<1x8xf32>
    %259 = vector.extract_strided_slice %256 {offsets = [0, 8], sizes = [1, 8], strides = [1, 1]} : vector<1x32xf32> to vector<1x8xf32>
    %260 = arith.mulf %259, %228 : vector<1x8xf32>
    %261 = vector.extract_strided_slice %256 {offsets = [0, 0], sizes = [1, 8], strides = [1, 1]} : vector<1x32xf32> to vector<1x8xf32>
    %262 = arith.mulf %261, %258 : vector<1x8xf32>
    %263 = arith.addf %260, %262 : vector<1x8xf32>
    %264 = vector.extract_strided_slice %256 {offsets = [0, 24], sizes = [1, 8], strides = [1, 1]} : vector<1x32xf32> to vector<1x8xf32>
    %265 = math.tanh %263 : vector<1x8xf32>
    %266 = arith.mulf %264, %265 : vector<1x8xf32>
    %cst_55 = arith.constant dense<0.000000e+00> : vector<1x32xf32>
    %267 = tpu.matmul %248, %54, %cst_55 {dimension_numbers = #tpu.dot_dimension_numbers<[1], [0], [0], [1], [0, 0, 1, 1], [], []>} : vector<1x8xf32>, vector<8x32xf32>, vector<1x32xf32> -> vector<1x32xf32>
    %268 = arith.addf %83, %267 : vector<1x32xf32>
    %269 = arith.negf %268 : vector<1x32xf32>
    %270 = math.exp %269 : vector<1x32xf32>
    %cst_56 = arith.constant 1.000000e+00 : f32
    %271 = vector.broadcast %cst_56 : f32 to vector<1x32xf32>
    %272 = arith.addf %271, %270 : vector<1x32xf32>
    %273 = arith.divf %271, %272 : vector<1x32xf32>
    %274 = vector.extract_strided_slice %268 {offsets = [0, 16], sizes = [1, 8], strides = [1, 1]} : vector<1x32xf32> to vector<1x8xf32>
    %275 = math.tanh %274 : vector<1x8xf32>
    %276 = vector.extract_strided_slice %273 {offsets = [0, 8], sizes = [1, 8], strides = [1, 1]} : vector<1x32xf32> to vector<1x8xf32>
    %277 = arith.mulf %276, %245 : vector<1x8xf32>
    %278 = vector.extract_strided_slice %273 {offsets = [0, 0], sizes = [1, 8], strides = [1, 1]} : vector<1x32xf32> to vector<1x8xf32>
    %279 = arith.mulf %278, %275 : vector<1x8xf32>
    %280 = arith.addf %277, %279 : vector<1x8xf32>
    %281 = vector.extract_strided_slice %273 {offsets = [0, 24], sizes = [1, 8], strides = [1, 1]} : vector<1x32xf32> to vector<1x8xf32>
    %282 = math.tanh %280 : vector<1x8xf32>
    %283 = arith.mulf %281, %282 : vector<1x8xf32>
    %284 = tpu.concatenate %283, %266 in 1 : vector<1x8xf32>, vector<1x8xf32> -> vector<1x16xf32>
    %cst_57 = arith.constant dense<0.000000e+00> : vector<1x32xf32>
    %285 = tpu.matmul %284, %55, %cst_57 {dimension_numbers = #tpu.dot_dimension_numbers<[1], [0], [0], [1], [0, 0, 1, 1], [], []>} : vector<1x16xf32>, vector<16x32xf32>, vector<1x32xf32> -> vector<1x32xf32>
    %286 = arith.addf %285, %53 : vector<1x32xf32>
    %287 = arith.negf %286 : vector<1x32xf32>
    %288 = math.exp %287 : vector<1x32xf32>
    %cst_58 = arith.constant 1.000000e+00 : f32
    %289 = vector.broadcast %cst_58 : f32 to vector<1x32xf32>
    %290 = arith.addf %289, %288 : vector<1x32xf32>
    %291 = arith.divf %289, %290 : vector<1x32xf32>
    %292 = vector.extract_strided_slice %286 {offsets = [0, 16], sizes = [1, 8], strides = [1, 1]} : vector<1x32xf32> to vector<1x8xf32>
    %293 = math.tanh %292 : vector<1x8xf32>
    %294 = vector.extract_strided_slice %291 {offsets = [0, 8], sizes = [1, 8], strides = [1, 1]} : vector<1x32xf32> to vector<1x8xf32>
    %295 = arith.mulf %294, %263 : vector<1x8xf32>
    %296 = vector.extract_strided_slice %291 {offsets = [0, 0], sizes = [1, 8], strides = [1, 1]} : vector<1x32xf32> to vector<1x8xf32>
    %297 = arith.mulf %296, %293 : vector<1x8xf32>
    %298 = arith.addf %295, %297 : vector<1x8xf32>
    %299 = vector.extract_strided_slice %291 {offsets = [0, 24], sizes = [1, 8], strides = [1, 1]} : vector<1x32xf32> to vector<1x8xf32>
    %300 = math.tanh %298 : vector<1x8xf32>
    %301 = arith.mulf %299, %300 : vector<1x8xf32>
    %cst_59 = arith.constant dense<0.000000e+00> : vector<1x32xf32>
    %302 = tpu.matmul %283, %54, %cst_59 {dimension_numbers = #tpu.dot_dimension_numbers<[1], [0], [0], [1], [0, 0, 1, 1], [], []>} : vector<1x8xf32>, vector<8x32xf32>, vector<1x32xf32> -> vector<1x32xf32>
    %303 = arith.addf %87, %302 : vector<1x32xf32>
    %304 = arith.negf %303 : vector<1x32xf32>
    %305 = math.exp %304 : vector<1x32xf32>
    %cst_60 = arith.constant 1.000000e+00 : f32
    %306 = vector.broadcast %cst_60 : f32 to vector<1x32xf32>
    %307 = arith.addf %306, %305 : vector<1x32xf32>
    %308 = arith.divf %306, %307 : vector<1x32xf32>
    %309 = vector.extract_strided_slice %303 {offsets = [0, 16], sizes = [1, 8], strides = [1, 1]} : vector<1x32xf32> to vector<1x8xf32>
    %310 = math.tanh %309 : vector<1x8xf32>
    %311 = vector.extract_strided_slice %308 {offsets = [0, 8], sizes = [1, 8], strides = [1, 1]} : vector<1x32xf32> to vector<1x8xf32>
    %312 = arith.mulf %311, %280 : vector<1x8xf32>
    %313 = vector.extract_strided_slice %308 {offsets = [0, 0], sizes = [1, 8], strides = [1, 1]} : vector<1x32xf32> to vector<1x8xf32>
    %314 = arith.mulf %313, %310 : vector<1x8xf32>
    %315 = arith.addf %312, %314 : vector<1x8xf32>
    %316 = vector.extract_strided_slice %308 {offsets = [0, 24], sizes = [1, 8], strides = [1, 1]} : vector<1x32xf32> to vector<1x8xf32>
    %317 = math.tanh %315 : vector<1x8xf32>
    %318 = arith.mulf %316, %317 : vector<1x8xf32>
    %319 = tpu.concatenate %318, %301 in 1 : vector<1x8xf32>, vector<1x8xf32> -> vector<1x16xf32>
    %cst_61 = arith.constant dense<0.000000e+00> : vector<1x32xf32>
    %320 = tpu.matmul %319, %55, %cst_61 {dimension_numbers = #tpu.dot_dimension_numbers<[1], [0], [0], [1], [0, 0, 1, 1], [], []>} : vector<1x16xf32>, vector<16x32xf32>, vector<1x32xf32> -> vector<1x32xf32>
    %321 = arith.addf %320, %53 : vector<1x32xf32>
    %322 = arith.negf %321 : vector<1x32xf32>
    %323 = math.exp %322 : vector<1x32xf32>
    %cst_62 = arith.constant 1.000000e+00 : f32
    %324 = vector.broadcast %cst_62 : f32 to vector<1x32xf32>
    %325 = arith.addf %324, %323 : vector<1x32xf32>
    %326 = arith.divf %324, %325 : vector<1x32xf32>
    %327 = vector.extract_strided_slice %321 {offsets = [0, 16], sizes = [1, 8], strides = [1, 1]} : vector<1x32xf32> to vector<1x8xf32>
    %328 = math.tanh %327 : vector<1x8xf32>
    %329 = vector.extract_strided_slice %326 {offsets = [0, 8], sizes = [1, 8], strides = [1, 1]} : vector<1x32xf32> to vector<1x8xf32>
    %330 = arith.mulf %329, %298 : vector<1x8xf32>
    %331 = vector.extract_strided_slice %326 {offsets = [0, 0], sizes = [1, 8], strides = [1, 1]} : vector<1x32xf32> to vector<1x8xf32>
    %332 = arith.mulf %331, %328 : vector<1x8xf32>
    %333 = arith.addf %330, %332 : vector<1x8xf32>
    %334 = vector.extract_strided_slice %326 {offsets = [0, 24], sizes = [1, 8], strides = [1, 1]} : vector<1x32xf32> to vector<1x8xf32>
    %335 = math.tanh %333 : vector<1x8xf32>
    %336 = arith.mulf %334, %335 : vector<1x8xf32>
    %cst_63 = arith.constant dense<0.000000e+00> : vector<1x32xf32>
    %337 = tpu.matmul %318, %54, %cst_63 {dimension_numbers = #tpu.dot_dimension_numbers<[1], [0], [0], [1], [0, 0, 1, 1], [], []>} : vector<1x8xf32>, vector<8x32xf32>, vector<1x32xf32> -> vector<1x32xf32>
    %338 = arith.addf %91, %337 : vector<1x32xf32>
    %339 = arith.negf %338 : vector<1x32xf32>
    %340 = math.exp %339 : vector<1x32xf32>
    %cst_64 = arith.constant 1.000000e+00 : f32
    %341 = vector.broadcast %cst_64 : f32 to vector<1x32xf32>
    %342 = arith.addf %341, %340 : vector<1x32xf32>
    %343 = arith.divf %341, %342 : vector<1x32xf32>
    %344 = vector.extract_strided_slice %338 {offsets = [0, 16], sizes = [1, 8], strides = [1, 1]} : vector<1x32xf32> to vector<1x8xf32>
    %345 = math.tanh %344 : vector<1x8xf32>
    %346 = vector.extract_strided_slice %343 {offsets = [0, 8], sizes = [1, 8], strides = [1, 1]} : vector<1x32xf32> to vector<1x8xf32>
    %347 = arith.mulf %346, %315 : vector<1x8xf32>
    %348 = vector.extract_strided_slice %343 {offsets = [0, 0], sizes = [1, 8], strides = [1, 1]} : vector<1x32xf32> to vector<1x8xf32>
    %349 = arith.mulf %348, %345 : vector<1x8xf32>
    %350 = arith.addf %347, %349 : vector<1x8xf32>
    %351 = vector.extract_strided_slice %343 {offsets = [0, 24], sizes = [1, 8], strides = [1, 1]} : vector<1x32xf32> to vector<1x8xf32>
    %352 = math.tanh %350 : vector<1x8xf32>
    %353 = arith.mulf %351, %352 : vector<1x8xf32>
    %354 = tpu.concatenate %353, %336 in 1 : vector<1x8xf32>, vector<1x8xf32> -> vector<1x16xf32>
    %cst_65 = arith.constant dense<0.000000e+00> : vector<1x32xf32>
    %355 = tpu.matmul %354, %55, %cst_65 {dimension_numbers = #tpu.dot_dimension_numbers<[1], [0], [0], [1], [0, 0, 1, 1], [], []>} : vector<1x16xf32>, vector<16x32xf32>, vector<1x32xf32> -> vector<1x32xf32>
    %356 = arith.addf %355, %53 : vector<1x32xf32>
    %357 = arith.negf %356 : vector<1x32xf32>
    %358 = math.exp %357 : vector<1x32xf32>
    %cst_66 = arith.constant 1.000000e+00 : f32
    %359 = vector.broadcast %cst_66 : f32 to vector<1x32xf32>
    %360 = arith.addf %359, %358 : vector<1x32xf32>
    %361 = arith.divf %359, %360 : vector<1x32xf32>
    %362 = vector.extract_strided_slice %356 {offsets = [0, 16], sizes = [1, 8], strides = [1, 1]} : vector<1x32xf32> to vector<1x8xf32>
    %363 = math.tanh %362 : vector<1x8xf32>
    %364 = vector.extract_strided_slice %361 {offsets = [0, 8], sizes = [1, 8], strides = [1, 1]} : vector<1x32xf32> to vector<1x8xf32>
    %365 = arith.mulf %364, %333 : vector<1x8xf32>
    %366 = vector.extract_strided_slice %361 {offsets = [0, 0], sizes = [1, 8], strides = [1, 1]} : vector<1x32xf32> to vector<1x8xf32>
    %367 = arith.mulf %366, %363 : vector<1x8xf32>
    %368 = arith.addf %365, %367 : vector<1x8xf32>
    %369 = vector.extract_strided_slice %361 {offsets = [0, 24], sizes = [1, 8], strides = [1, 1]} : vector<1x32xf32> to vector<1x8xf32>
    %370 = math.tanh %368 : vector<1x8xf32>
    %371 = arith.mulf %369, %370 : vector<1x8xf32>
    %372 = vector.shape_cast %371 : vector<1x8xf32> to vector<1x8xf32>
    %373 = vector.broadcast %372 : vector<1x8xf32> to vector<8x8xf32>
    %374 = tpu.concatenate %0, %373 in 1 : vector<8x4xf32>, vector<8x8xf32> -> vector<8x12xf32>
    %c0_67 = arith.constant 0 : index
    %c0_68 = arith.constant 0 : index
    %375 = vector.load %arg3[%c0_67, %c0_68] : memref<8x12xf32, #tpu.memory_space<vmem>>, vector<8x12xf32>
    tpu.vector_store %arg3[%c0_67, %c0_68], %374 {strides = array<i32>} : memref<8x12xf32, #tpu.memory_space<vmem>>, vector<8x12xf32>,
    return
  }
}

</mosaic_0001>

<llo_original>
// kernel: tpu_custom_call.1
$region0: #{tpu_custom_call.1}
  #allocation0 [shape = 'u32[]', space=smem, size = 0x4, offset = 0x4, fixed_abs, tag = 'smem constant byte address 0x4 - core index']
  #allocation1 [shape = 'u32[144,128]{1,0:T(1,128)}', space=vmem, size = 0x12000, scoped, tag = 'internal scratch']
  #allocation2 [shape = 'f32[10,20]{1,0:T(8,128)}', space=vmem, size = 0x2000, scoped, tag = 'scratch operand']
  %s0 = inlined_call_operand.vmem [shape: f32[8,4], index: 0, kind: input, shape index: {}]
  %s1 = inlined_call_operand.vmem [shape: f32[22,8], index: 1, kind: input, shape index: {}]
  %s2 = inlined_call_operand.vmem [shape: f32[27,32], index: 2, kind: input, shape index: {}]
  %s3 = inlined_call_operand.hbm [shape: f32[8,12], index: 3, kind: output, shape index: {}]
  %s4 = sld [smem:[#allocation0]]
  $region22: #{tpu_custom_call.1} parent=0
    _
  %s6 = ssub.s32 1, %s4
  %s7 = scalar_select 0, %s6, %s4
  $region1: #{tpu_custom_call.1} parent=0
    #allocation3 [shape = 'u8[4096]{0}', space=vmem, size = 0x1000, scoped, tag = 'output window, operand 0, single buffered']
    #allocation4 [shape = 's32[1]{0}', space=sflag, size = 0x4, scoped, tag = 'scoped memory for tpu_custom_call.1']
    %8 = vsyncpa [#allocation4], 0
    // Predicated region
    $region2: #{tpu_custom_call.1} parent=1 // pred_check
      _
    $region3: #{tpu_custom_call.1} parent=1 // pred_check_branch
      %10 = sbr.rel (0) target = $region5
    $region4: #{tpu_custom_call.1} parent=1 // pred_region
      _
    $region5: #{tpu_custom_call.1} parent=1 // pred_fallthru
      _
    // Predicated region
    $region6: #{tpu_custom_call.1} parent=1 // pred_check
      _
    $region7: #{tpu_custom_call.1} parent=1 // pred_check_branch
      %12 = sbr.rel (0) target = $region9
    $region8: #{tpu_custom_call.1} parent=1 // pred_region
      _
    $region9: #{tpu_custom_call.1} parent=1 // pred_fallthru
      _
    // Predicated region
    $region10: #{tpu_custom_call.1} parent=1 // pred_check
      _
    $region11: #{tpu_custom_call.1} parent=1 // pred_check_branch
      %14 = sbr.rel (0) target = $region13
    $region12: #{tpu_custom_call.1} parent=1 // pred_region
      _
    $region13: #{tpu_custom_call.1} parent=1 // pred_fallthru
      _
    %v15 = vld [vmem:[%s0] sm:$0xff]
    %vm16 = vcmask 162816
    %17 = vst.msk [vmem:[#allocation2] sm:$0xff] %vm16, 0.0
    %vm18 = vcmask 156672
    %19 = vst.msk [vmem:[#allocation2 + $0x8] sm:$0x3] %vm18, 0.0
    %vm20 = vcmask 30720
    %21 = vst.msk [vmem:[#allocation2 + $0x3] sm:$0x7f] %vm20, %v15
    %23 = vrot.lane.b32.xlu0 %v15, 4
    %v24 = vpop.permute.xlu0 %23
    %vm26 = vcmask 64544
    %27 = vst.msk [vmem:[#allocation2 + $0x2] sm:$0xff] %vm26, %v24
    %28 = vrot.lane.b32.xlu0 %v15, 8
    %v29 = vpop.permute.xlu0 %28
    %vm31 = vcmask 97344
    %32 = vst.msk [vmem:[#allocation2 + $0x1] sm:$0xff] %vm31, %v29
    %33 = vrot.lane.b32.xlu0 %v15, 12
    %v34 = vpop.permute.xlu0 %33
    %vm36 = vcmask 130144
    %37 = vst.msk [vmem:[#allocation2] sm:$0xff] %vm36, %v34
    %38 = vrot.lane.b32.xlu0 %v15, 16
    %v39 = vpop.permute.xlu0 %38
    %vm41 = vcmask 162945
    %42 = vst.msk [vmem:[#allocation2 - $0x1] sm:$0xfe] %vm41, %v39
    %v43 = vld [vmem:[#allocation2] sm:$0xff]
    %v44 = vld [vmem:[#allocation2 + $0x8] sm:$0x3]
    %v45 = vld [vmem:[%s1] sm:$0xff]
    %v46 = vld [vmem:[%s1 + $0x8] sm:$0xff]
    %v47 = vld [vmem:[%s1 + $0x10] sm:$0xf]
    %v49 = vsel %vm16, %v43, 0
    %v52 = vsel %vm16, %v44, 0
    %vm54 = vcmask 1043456
    %v56 = vsel %vm54, %v47, 0
    %58 = vmatprep.subr.mxu0 0.0
    %59 = vmatpush1.msra.mxu0 0.0
    %60 = vmatprep.subr.mxu0 0.0
    %61 = vmatpush1.msra.mxu0 0.0
    %62 = vmatprep.subr.mxu0 0.0
    %63 = vmatpush1.msra.mxu0 0.0
    %64 = vmatprep.subr.mxu0 0.0
    %65 = vmatpush1.msra.mxu0 0.0
    %66 = vmatprep.subr.mxu0 0.0
    %67 = vmatpush1.msra.mxu0 0.0
    %68 = vmatprep.subr.mxu0 0.0
    %69 = vmatpush1.msra.mxu0 0.0
    %70 = vmatprep.subr.mxu0 0.0
    %71 = vmatpush1.msra.mxu0 0.0
    %72 = vmatprep.subr.mxu0 0.0
    %73 = vmatpush1.msra.mxu0 0.0
    %74 = vmatprep.subr.mxu0 0.0
    %75 = vmatpush1.msra.mxu0 0.0
    %76 = vmatprep.subr.mxu0 0.0
    %77 = vmatpush1.msra.mxu0 0.0
    %78 = vmatprep.subr.mxu0 0.0
    %79 = vmatpush1.msra.mxu0 0.0
    %80 = vmatprep.subr.mxu0 0.0
    %81 = vmatpush1.msra.mxu0 0.0
    %82 = vmatprep.subr.mxu0 0.0
    %83 = vmatpush1.msra.mxu0 0.0
    %84 = vmatprep.subr.mxu0 0.0
    %85 = vmatpush1.msra.mxu0 %v56
    %86 = vmatprep.subr.mxu0 0.0
    %87 = vmatpush1.msra.mxu0 %v46
    %88 = vmatprep.subr.mxu0 0.0
    %89 = vmatpush1.msra.mxu0 %v45
    %90 = vmatprep.subr.mxu0 0.0
    %91 = vmatpush2.msra.mxu0 0.0
    %92 = vmatprep.subr.mxu0 0.0
    %93 = vmatpush2.msra.mxu0 0.0
    %94 = vmatprep.subr.mxu0 0.0
    %95 = vmatpush2.msra.mxu0 0.0
    %96 = vmatprep.subr.mxu0 0.0
    %97 = vmatpush2.msra.mxu0 0.0
    %98 = vmatprep.subr.mxu0 0.0
    %99 = vmatpush2.msra.mxu0 0.0
    %100 = vmatprep.subr.mxu0 0.0
    %101 = vmatpush2.msra.mxu0 0.0
    %102 = vmatprep.subr.mxu0 0.0
    %103 = vmatpush2.msra.mxu0 0.0
    %104 = vmatprep.subr.mxu0 0.0
    %105 = vmatpush2.msra.mxu0 0.0
    %106 = vmatprep.subr.mxu0 0.0
    %107 = vmatpush2.msra.mxu0 0.0
    %108 = vmatprep.subr.mxu0 0.0
    %109 = vmatpush2.msra.mxu0 0.0
    %110 = vmatprep.subr.mxu0 0.0
    %111 = vmatpush2.msra.mxu0 0.0
    %112 = vmatprep.subr.mxu0 0.0
    %113 = vmatpush2.msra.mxu0 0.0
    %114 = vmatprep.subr.mxu0 0.0
    %115 = vmatpush2.msra.mxu0 0.0
    %116 = vmatprep.subr.mxu0 0.0
    %117 = vmatpush2.msra.mxu0 0.0
    %118 = vmatprep.subr.mxu0 0.0
    %119 = vmatpush2.msra.mxu0 0.0
    %120 = vmatprep.subr.mxu0 0.0
    %121 = vmatpush2.msra.mxu0 0.0
    %122 = vmatprep.mubr.f32.mxu0 0.0
    %123 = vmatmul.mubr.f32.gmra.mxu0 %v49
    %v124 = vpop.f32.mrf.mxu0
    %v125 = vadd.f32 0.0, %v124
    %v126 = vpop.f32.mrf.mxu0
    %127 = vmatprep.mubr.f32.mxu0 0.0
    %128 = vmatmul.mubr.f32.gmra.mxu0 %v52
    %v129 = vpop.f32.mrf.mxu0
    %v130 = vadd.f32 0.0, %v129
    %v131 = vpop.f32.mrf.mxu0
    %132 = vdwg.mxu0
    %v133 = vld [vmem:[%s1 + $0x14] sm:$0x1]
    %v134 = vld [vmem:[%s1 + $0x15] sm:$0x1]
    %vm135 = vcmask 64512
    %v136 = vsel %vm135, %v125, 0.0
    %vm137 = vcmask 58368
    %v138 = vsel %vm137, %v130, 0.0
    %v139 = vadd.f32 %v136, %v138
    %v140 = vrot.slane %v139, 4
    %v141 = vadd.f32 %v139, %v140
    %v142 = vrot.slane %v141, 2
    %v143 = vadd.f32 %v141, %v142
    %v144 = vrot.slane %v143, 1
    %v145 = vadd.f32 %v143, %v144
    %v146 = vrcp.pop 10.0
    %v147 = vmul.f32 %v145, %v146
    %v148 = vsub.f32 %v125, %v147
    %v149 = vsub.f32 %v130, %v147
    %v150 = vmul.f32 %v148, %v148
    %v151 = vmul.f32 %v149, %v149
    %v152 = vsel %vm135, %v150, 0.0
    %v153 = vsel %vm137, %v151, 0.0
    %v154 = vadd.f32 %v152, %v153
    %v155 = vrot.slane %v154, 4
    %v156 = vadd.f32 %v154, %v155
    %v157 = vrot.slane %v156, 2
    %v158 = vadd.f32 %v156, %v157
    %v159 = vrot.slane %v158, 1
    %v160 = vadd.f32 %v158, %v159
    %v161 = vmul.f32 %v160, %v146
    %v162 = vadd.f32 %v161, 1e-05
    %v163 = vrsqrt.pop %v162
    %v164 = vmul.f32 %v148, %v163
    %v165 = vlaneseq
    %v166 = vshrl.u32 %v165, 7
    %v167 = vsub.s32 0, %v166
    %v168 = vrot.slane %v133, %v167
    %v169 = vmul.f32 %v164, %v168
    %v170 = vlaneseq
    %v171 = vshrl.u32 %v170, 7
    %v172 = vsub.s32 0, %v171
    %v173 = vrot.slane %v134, %v172
    %v174 = vadd.f32 %v169, %v173
    %v175 = vxor.u32 %v174, 2147483648
    %v176 = vmul.f32 %v175, 1.442695
    %v177 = vpow.pop %v176
    %v178 = vadd.f32 %v177, 1.0
    %v179 = vrcp.pop %v178
    %v180 = vmul.f32 1.0, %v179
    %v181 = vadd.f32 %v180, 1.0
    %v182 = vlog2.pop %v181
    %v183 = vmul.f32 %v182, 0.6931472
    %v184 = vmul.f32 %v174, %v183
    %vm185 = vcmask 63488
    %v186 = vsel %vm185, %v184, 0.0
    %v187 = vrot.slane %v186, 4
    %v188 = vadd.f32 %v186, %v187
    %v189 = vrot.slane %v188, 2
    %v190 = vadd.f32 %v188, %v189
    %v191 = vrot.slane %v190, 1
    %v192 = vadd.f32 %v190, %v191
    %v193 = vmul.f32 %v192, 0.125
    %v194 = vld [vmem:[%s2] sm:$0x1]
    %v195 = vld [vmem:[%s2 + $0x1] sm:$0x1]
    %v196 = vld [vmem:[%s2 + $0x2] sm:$0x1]
    %v197 = vld [vmem:[%s2 + $0x3] sm:$0xff]
    %v198 = vld [vmem:[%s2 + $0xb] sm:$0xff]
    %v199 = vld [vmem:[%s2 + $0x13] sm:$0xff]
    %201 = vset.pattern.permute.xlu0 0
    %202 = vperm.xlu0 %201, %v193
    %v203 = vpop.permute.xlu0 %202
    %v205 = vmul.f32 %v203, %v194
    %v206 = vadd.f32 %v205, %v195
    %207 = vset.pattern.permute.xlu0 1
    %208 = vperm.xlu0 %207, %v193
    %v209 = vpop.permute.xlu0 %208
    %v211 = vmul.f32 %v209, %v194
    %v212 = vadd.f32 %v211, %v195
    %213 = vset.pattern.permute.xlu0 2
    %214 = vperm.xlu0 %213, %v193
    %v215 = vpop.permute.xlu0 %214
    %v217 = vmul.f32 %v215, %v194
    %v218 = vadd.f32 %v217, %v195
    %219 = vset.pattern.permute.xlu0 3
    %220 = vperm.xlu0 %219, %v193
    %v221 = vpop.permute.xlu0 %220
    %v223 = vmul.f32 %v221, %v194
    %v224 = vadd.f32 %v223, %v195
    %225 = vset.pattern.permute.xlu0 4
    %226 = vperm.xlu0 %225, %v193
    %v227 = vpop.permute.xlu0 %226
    %v229 = vmul.f32 %v227, %v194
    %v230 = vadd.f32 %v229, %v195
    %231 = vset.pattern.permute.xlu0 5
    %232 = vperm.xlu0 %231, %v193
    %v233 = vpop.permute.xlu0 %232
    %v235 = vmul.f32 %v233, %v194
    %v236 = vadd.f32 %v235, %v195
    %237 = vset.pattern.permute.xlu0 6
    %238 = vperm.xlu0 %237, %v193
    %v239 = vpop.permute.xlu0 %238
    %v241 = vmul.f32 %v239, %v194
    %v242 = vadd.f32 %v241, %v195
    %243 = vset.pattern.permute.xlu0 7
    %244 = vperm.xlu0 %243, %v193
    %v245 = vpop.permute.xlu0 %244
    %v247 = vmul.f32 %v245, %v194
    %v248 = vadd.f32 %v247, %v195
    %v250 = vsel %vm135, 0.0, 0
    %252 = vmatprep.subr.mxu0 0.0
    %253 = vmatpush1.msra.mxu0 0.0
    %254 = vmatprep.subr.mxu0 0.0
    %255 = vmatpush1.msra.mxu0 0.0
    %256 = vmatprep.subr.mxu0 0.0
    %257 = vmatpush1.msra.mxu0 0.0
    %258 = vmatprep.subr.mxu0 0.0
    %259 = vmatpush1.msra.mxu0 0.0
    %260 = vmatprep.subr.mxu0 0.0
    %261 = vmatpush1.msra.mxu0 0.0
    %262 = vmatprep.subr.mxu0 0.0
    %263 = vmatpush1.msra.mxu0 0.0
    %264 = vmatprep.subr.mxu0 0.0
    %265 = vmatpush1.msra.mxu0 0.0
    %266 = vmatprep.subr.mxu0 0.0
    %267 = vmatpush1.msra.mxu0 0.0
    %268 = vmatprep.subr.mxu0 0.0
    %269 = vmatpush1.msra.mxu0 0.0
    %270 = vmatprep.subr.mxu0 0.0
    %271 = vmatpush1.msra.mxu0 0.0
    %272 = vmatprep.subr.mxu0 0.0
    %273 = vmatpush1.msra.mxu0 0.0
    %274 = vmatprep.subr.mxu0 0.0
    %275 = vmatpush1.msra.mxu0 0.0
    %276 = vmatprep.subr.mxu0 0.0
    %277 = vmatpush1.msra.mxu0 0.0
    %278 = vmatprep.subr.mxu0 0.0
    %279 = vmatpush1.msra.mxu0 0.0
    %280 = vmatprep.subr.mxu0 0.0
    %281 = vmatpush1.msra.mxu0 0.0
    %282 = vmatprep.subr.mxu0 0.0
    %283 = vmatpush1.msra.mxu0 %v197
    %284 = vmatprep.subr.mxu0 0.0
    %285 = vmatpush2.msra.mxu0 0.0
    %286 = vmatprep.subr.mxu0 0.0
    %287 = vmatpush2.msra.mxu0 0.0
    %288 = vmatprep.subr.mxu0 0.0
    %289 = vmatpush2.msra.mxu0 0.0
    %290 = vmatprep.subr.mxu0 0.0
    %291 = vmatpush2.msra.mxu0 0.0
    %292 = vmatprep.subr.mxu0 0.0
    %293 = vmatpush2.msra.mxu0 0.0
    %294 = vmatprep.subr.mxu0 0.0
    %295 = vmatpush2.msra.mxu0 0.0
    %296 = vmatprep.subr.mxu0 0.0
    %297 = vmatpush2.msra.mxu0 0.0
    %298 = vmatprep.subr.mxu0 0.0
    %299 = vmatpush2.msra.mxu0 0.0
    %300 = vmatprep.subr.mxu0 0.0
    %301 = vmatpush2.msra.mxu0 0.0
    %302 = vmatprep.subr.mxu0 0.0
    %303 = vmatpush2.msra.mxu0 0.0
    %304 = vmatprep.subr.mxu0 0.0
    %305 = vmatpush2.msra.mxu0 0.0
    %306 = vmatprep.subr.mxu0 0.0
    %307 = vmatpush2.msra.mxu0 0.0
    %308 = vmatprep.subr.mxu0 0.0
    %309 = vmatpush2.msra.mxu0 0.0
    %310 = vmatprep.subr.mxu0 0.0
    %311 = vmatpush2.msra.mxu0 0.0
    %312 = vmatprep.subr.mxu0 0.0
    %313 = vmatpush2.msra.mxu0 0.0
    %314 = vmatprep.subr.mxu0 0.0
    %315 = vmatpush2.msra.mxu0 0.0
    %316 = vmatprep.mubr.f32.mxu0 0.0
    %317 = vmatmul.mubr.f32.gmra.mxu0 %v250
    %v318 = vpop.f32.mrf.mxu0
    %v319 = vadd.f32 0.0, %v318
    %v320 = vpop.f32.mrf.mxu0
    %321 = vdwg.mxu0
    %v322 = vadd.f32 %v206, %v319
    %v323 = vxor.u32 %v322, 2147483648
    %v324 = vmul.f32 %v323, 1.442695
    %v325 = vpow.pop %v324
    %v326 = vadd.f32 %v325, 1.0
    %v327 = vrcp.pop %v326
    %v328 = vmul.f32 1.0, %v327
    %v329 = vtanh.pop %v322
    %v330 = vmul.f32 %v328, 0.0
    %332 = vrot.lane.b32.xlu0 %v329, 112
    %v333 = vpop.permute.xlu0 %332
    %v335 = vmul.f32 %v328, %v333
    %337 = vrot.lane.b32.xlu0 %v335, 8
    %v338 = vpop.permute.xlu0 %337
    %v340 = vadd.f32 %v330, %v338
    %v341 = vtanh.pop %v340
    %343 = vrot.lane.b32.xlu0 %v341, 16
    %v344 = vpop.permute.xlu0 %343
    %v346 = vmul.f32 %v328, %v344
    %348 = vrot.lane.b32.xlu0 %v346, 104
    %v349 = vpop.permute.xlu0 %348
    %v351 = vsel %vm135, %v349, 0.0
    %vm352 = vcmask 130048
    %v354 = vsel %vm352, %v351, 0
    %356 = vmatprep.subr.mxu0 0.0
    %357 = vmatpush1.msra.mxu0 0.0
    %358 = vmatprep.subr.mxu0 0.0
    %359 = vmatpush1.msra.mxu0 0.0
    %360 = vmatprep.subr.mxu0 0.0
    %361 = vmatpush1.msra.mxu0 0.0
    %362 = vmatprep.subr.mxu0 0.0
    %363 = vmatpush1.msra.mxu0 0.0
    %364 = vmatprep.subr.mxu0 0.0
    %365 = vmatpush1.msra.mxu0 0.0
    %366 = vmatprep.subr.mxu0 0.0
    %367 = vmatpush1.msra.mxu0 0.0
    %368 = vmatprep.subr.mxu0 0.0
    %369 = vmatpush1.msra.mxu0 0.0
    %370 = vmatprep.subr.mxu0 0.0
    %371 = vmatpush1.msra.mxu0 0.0
    %372 = vmatprep.subr.mxu0 0.0
    %373 = vmatpush1.msra.mxu0 0.0
    %374 = vmatprep.subr.mxu0 0.0
    %375 = vmatpush1.msra.mxu0 0.0
    %376 = vmatprep.subr.mxu0 0.0
    %377 = vmatpush1.msra.mxu0 0.0
    %378 = vmatprep.subr.mxu0 0.0
    %379 = vmatpush1.msra.mxu0 0.0
    %380 = vmatprep.subr.mxu0 0.0
    %381 = vmatpush1.msra.mxu0 0.0
    %382 = vmatprep.subr.mxu0 0.0
    %383 = vmatpush1.msra.mxu0 0.0
    %384 = vmatprep.subr.mxu0 0.0
    %385 = vmatpush1.msra.mxu0 %v199
    %386 = vmatprep.subr.mxu0 0.0
    %387 = vmatpush1.msra.mxu0 %v198
    %388 = vmatprep.subr.mxu0 0.0
    %389 = vmatpush2.msra.mxu0 0.0
    %390 = vmatprep.subr.mxu0 0.0
    %391 = vmatpush2.msra.mxu0 0.0
    %392 = vmatprep.subr.mxu0 0.0
    %393 = vmatpush2.msra.mxu0 0.0
    %394 = vmatprep.subr.mxu0 0.0
    %395 = vmatpush2.msra.mxu0 0.0
    %396 = vmatprep.subr.mxu0 0.0
    %397 = vmatpush2.msra.mxu0 0.0
    %398 = vmatprep.subr.mxu0 0.0
    %399 = vmatpush2.msra.mxu0 0.0
    %400 = vmatprep.subr.mxu0 0.0
    %401 = vmatpush2.msra.mxu0 0.0
    %402 = vmatprep.subr.mxu0 0.0
    %403 = vmatpush2.msra.mxu0 0.0
    %404 = vmatprep.subr.mxu0 0.0
    %405 = vmatpush2.msra.mxu0 0.0
    %406 = vmatprep.subr.mxu0 0.0
    %407 = vmatpush2.msra.mxu0 0.0
    %408 = vmatprep.subr.mxu0 0.0
    %409 = vmatpush2.msra.mxu0 0.0
    %410 = vmatprep.subr.mxu0 0.0
    %411 = vmatpush2.msra.mxu0 0.0
    %412 = vmatprep.subr.mxu0 0.0
    %413 = vmatpush2.msra.mxu0 0.0
    %414 = vmatprep.subr.mxu0 0.0
    %415 = vmatpush2.msra.mxu0 0.0
    %416 = vmatprep.subr.mxu0 0.0
    %417 = vmatpush2.msra.mxu0 0.0
    %418 = vmatprep.subr.mxu0 0.0
    %419 = vmatpush2.msra.mxu0 0.0
    %420 = vmatprep.mubr.f32.mxu0 0.0
    %421 = vmatmul.mubr.f32.gmra.mxu0 %v354
    %v422 = vpop.f32.mrf.mxu0
    %v423 = vadd.f32 %v196, %v422
    %v424 = vpop.f32.mrf.mxu0
    %425 = vdwg.mxu0
    %v426 = vxor.u32 %v423, 2147483648
    %v427 = vmul.f32 %v426, 1.442695
    %v428 = vpow.pop %v427
    %v429 = vadd.f32 %v428, 1.0
    %v430 = vrcp.pop %v429
    %v431 = vmul.f32 1.0, %v430
    %v432 = vtanh.pop %v423
    %v433 = vmul.f32 %v431, 0.0
    %435 = vrot.lane.b32.xlu0 %v432, 112
    %v436 = vpop.permute.xlu0 %435
    %v438 = vmul.f32 %v431, %v436
    %440 = vrot.lane.b32.xlu0 %v438, 8
    %v441 = vpop.permute.xlu0 %440
    %v443 = vadd.f32 %v433, %v441
    %v444 = vtanh.pop %v443
    %446 = vrot.lane.b32.xlu0 %v444, 16
    %v447 = vpop.permute.xlu0 %446
    %v449 = vmul.f32 %v431, %v447
    %v450 = vsel %vm135, %v349, 0
    %452 = vmatprep.subr.mxu0 0.0
    %453 = vmatpush1.msra.mxu0 0.0
    %454 = vmatprep.subr.mxu0 0.0
    %455 = vmatpush1.msra.mxu0 0.0
    %456 = vmatprep.subr.mxu0 0.0
    %457 = vmatpush1.msra.mxu0 0.0
    %458 = vmatprep.subr.mxu0 0.0
    %459 = vmatpush1.msra.mxu0 0.0
    %460 = vmatprep.subr.mxu0 0.0
    %461 = vmatpush1.msra.mxu0 0.0
    %462 = vmatprep.subr.mxu0 0.0
    %463 = vmatpush1.msra.mxu0 0.0
    %464 = vmatprep.subr.mxu0 0.0
    %465 = vmatpush1.msra.mxu0 0.0
    %466 = vmatprep.subr.mxu0 0.0
    %467 = vmatpush1.msra.mxu0 0.0
    %468 = vmatprep.subr.mxu0 0.0
    %469 = vmatpush1.msra.mxu0 0.0
    %470 = vmatprep.subr.mxu0 0.0
    %471 = vmatpush1.msra.mxu0 0.0
    %472 = vmatprep.subr.mxu0 0.0
    %473 = vmatpush1.msra.mxu0 0.0
    %474 = vmatprep.subr.mxu0 0.0
    %475 = vmatpush1.msra.mxu0 0.0
    %476 = vmatprep.subr.mxu0 0.0
    %477 = vmatpush1.msra.mxu0 0.0
    %478 = vmatprep.subr.mxu0 0.0
    %479 = vmatpush1.msra.mxu0 0.0
    %480 = vmatprep.subr.mxu0 0.0
    %481 = vmatpush1.msra.mxu0 0.0
    %482 = vmatprep.subr.mxu0 0.0
    %483 = vmatpush1.msra.mxu0 %v197
    %484 = vmatprep.subr.mxu0 0.0
    %485 = vmatpush2.msra.mxu0 0.0
    %486 = vmatprep.subr.mxu0 0.0
    %487 = vmatpush2.msra.mxu0 0.0
    %488 = vmatprep.subr.mxu0 0.0
    %489 = vmatpush2.msra.mxu0 0.0
    %490 = vmatprep.subr.mxu0 0.0
    %491 = vmatpush2.msra.mxu0 0.0
    %492 = vmatprep.subr.mxu0 0.0
    %493 = vmatpush2.msra.mxu0 0.0
    %494 = vmatprep.subr.mxu0 0.0
    %495 = vmatpush2.msra.mxu0 0.0
    %496 = vmatprep.subr.mxu0 0.0
    %497 = vmatpush2.msra.mxu0 0.0
    %498 = vmatprep.subr.mxu0 0.0
    %499 = vmatpush2.msra.mxu0 0.0
    %500 = vmatprep.subr.mxu0 0.0
    %501 = vmatpush2.msra.mxu0 0.0
    %502 = vmatprep.subr.mxu0 0.0
    %503 = vmatpush2.msra.mxu0 0.0
    %504 = vmatprep.subr.mxu0 0.0
    %505 = vmatpush2.msra.mxu0 0.0
    %506 = vmatprep.subr.mxu0 0.0
    %507 = vmatpush2.msra.mxu0 0.0
    %508 = vmatprep.subr.mxu0 0.0
    %509 = vmatpush2.msra.mxu0 0.0
    %510 = vmatprep.subr.mxu0 0.0
    %511 = vmatpush2.msra.mxu0 0.0
    %512 = vmatprep.subr.mxu0 0.0
    %513 = vmatpush2.msra.mxu0 0.0
    %514 = vmatprep.subr.mxu0 0.0
    %515 = vmatpush2.msra.mxu0 0.0
    %516 = vmatprep.mubr.f32.mxu0 0.0
    %517 = vmatmul.mubr.f32.gmra.mxu0 %v450
    %v518 = vpop.f32.mrf.mxu0
    %v519 = vadd.f32 0.0, %v518
    %v520 = vpop.f32.mrf.mxu0
    %521 = vdwg.mxu0
    %v522 = vadd.f32 %v212, %v519
    %v523 = vxor.u32 %v522, 2147483648
    %v524 = vmul.f32 %v523, 1.442695
    %v525 = vpow.pop %v524
    %v526 = vadd.f32 %v525, 1.0
    %v527 = vrcp.pop %v526
    %v528 = vmul.f32 1.0, %v527
    %v529 = vtanh.pop %v522
    %v530 = vmul.f32 %v528, %v340
    %532 = vrot.lane.b32.xlu0 %v529, 112
    %v533 = vpop.permute.xlu0 %532
    %v535 = vmul.f32 %v528, %v533
    %537 = vrot.lane.b32.xlu0 %v535, 8
    %v538 = vpop.permute.xlu0 %537
    %v540 = vadd.f32 %v530, %v538
    %v541 = vtanh.pop %v540
    %543 = vrot.lane.b32.xlu0 %v541, 16
    %v544 = vpop.permute.xlu0 %543
    %v546 = vmul.f32 %v528, %v544
    %548 = vrot.lane.b32.xlu0 %v546, 104
    %v549 = vpop.permute.xlu0 %548
    %552 = vrot.lane.b32.xlu0 %v449, 112
    %v553 = vpop.permute.xlu0 %552
    %v555 = vsel %vm135, %v549, %v553
    %v557 = vsel %vm352, %v555, 0
    %559 = vmatprep.subr.mxu0 0.0
    %560 = vmatpush1.msra.mxu0 0.0
    %561 = vmatprep.subr.mxu0 0.0
    %562 = vmatpush1.msra.mxu0 0.0
    %563 = vmatprep.subr.mxu0 0.0
    %564 = vmatpush1.msra.mxu0 0.0
    %565 = vmatprep.subr.mxu0 0.0
    %566 = vmatpush1.msra.mxu0 0.0
    %567 = vmatprep.subr.mxu0 0.0
    %568 = vmatpush1.msra.mxu0 0.0
    %569 = vmatprep.subr.mxu0 0.0
    %570 = vmatpush1.msra.mxu0 0.0
    %571 = vmatprep.subr.mxu0 0.0
    %572 = vmatpush1.msra.mxu0 0.0
    %573 = vmatprep.subr.mxu0 0.0
    %574 = vmatpush1.msra.mxu0 0.0
    %575 = vmatprep.subr.mxu0 0.0
    %576 = vmatpush1.msra.mxu0 0.0
    %577 = vmatprep.subr.mxu0 0.0
    %578 = vmatpush1.msra.mxu0 0.0
    %579 = vmatprep.subr.mxu0 0.0
    %580 = vmatpush1.msra.mxu0 0.0
    %581 = vmatprep.subr.mxu0 0.0
    %582 = vmatpush1.msra.mxu0 0.0
    %583 = vmatprep.subr.mxu0 0.0
    %584 = vmatpush1.msra.mxu0 0.0
    %585 = vmatprep.subr.mxu0 0.0
    %586 = vmatpush1.msra.mxu0 0.0
    %587 = vmatprep.subr.mxu0 0.0
    %588 = vmatpush1.msra.mxu0 %v199
    %589 = vmatprep.subr.mxu0 0.0
    %590 = vmatpush1.msra.mxu0 %v198
    %591 = vmatprep.subr.mxu0 0.0
    %592 = vmatpush2.msra.mxu0 0.0
    %593 = vmatprep.subr.mxu0 0.0
    %594 = vmatpush2.msra.mxu0 0.0
    %595 = vmatprep.subr.mxu0 0.0
    %596 = vmatpush2.msra.mxu0 0.0
    %597 = vmatprep.subr.mxu0 0.0
    %598 = vmatpush2.msra.mxu0 0.0
    %599 = vmatprep.subr.mxu0 0.0
    %600 = vmatpush2.msra.mxu0 0.0
    %601 = vmatprep.subr.mxu0 0.0
    %602 = vmatpush2.msra.mxu0 0.0
    %603 = vmatprep.subr.mxu0 0.0
    %604 = vmatpush2.msra.mxu0 0.0
    %605 = vmatprep.subr.mxu0 0.0
    %606 = vmatpush2.msra.mxu0 0.0
    %607 = vmatprep.subr.mxu0 0.0
    %608 = vmatpush2.msra.mxu0 0.0
    %609 = vmatprep.subr.mxu0 0.0
    %610 = vmatpush2.msra.mxu0 0.0
    %611 = vmatprep.subr.mxu0 0.0
    %612 = vmatpush2.msra.mxu0 0.0
    %613 = vmatprep.subr.mxu0 0.0
    %614 = vmatpush2.msra.mxu0 0.0
    %615 = vmatprep.subr.mxu0 0.0
    %616 = vmatpush2.msra.mxu0 0.0
    %617 = vmatprep.subr.mxu0 0.0
    %618 = vmatpush2.msra.mxu0 0.0
    %619 = vmatprep.subr.mxu0 0.0
    %620 = vmatpush2.msra.mxu0 0.0
    %621 = vmatprep.subr.mxu0 0.0
    %622 = vmatpush2.msra.mxu0 0.0
    %623 = vmatprep.mubr.f32.mxu0 0.0
    %624 = vmatmul.mubr.f32.gmra.mxu0 %v557
    %v625 = vpop.f32.mrf.mxu0
    %v626 = vadd.f32 %v196, %v625
    %v627 = vpop.f32.mrf.mxu0
    %628 = vdwg.mxu0
    %v629 = vxor.u32 %v626, 2147483648
    %v630 = vmul.f32 %v629, 1.442695
    %v631 = vpow.pop %v630
    %v632 = vadd.f32 %v631, 1.0
    %v633 = vrcp.pop %v632
    %v634 = vmul.f32 1.0, %v633
    %v635 = vtanh.pop %v626
    %v636 = vmul.f32 %v634, %v443
    %638 = vrot.lane.b32.xlu0 %v635, 112
    %v639 = vpop.permute.xlu0 %638
    %v641 = vmul.f32 %v634, %v639
    %643 = vrot.lane.b32.xlu0 %v641, 8
    %v644 = vpop.permute.xlu0 %643
    %v646 = vadd.f32 %v636, %v644
    %v647 = vtanh.pop %v646
    %649 = vrot.lane.b32.xlu0 %v647, 16
    %v650 = vpop.permute.xlu0 %649
    %v652 = vmul.f32 %v634, %v650
    %v653 = vsel %vm135, %v549, 0
    %655 = vmatprep.subr.mxu0 0.0
    %656 = vmatpush1.msra.mxu0 0.0
    %657 = vmatprep.subr.mxu0 0.0
    %658 = vmatpush1.msra.mxu0 0.0
    %659 = vmatprep.subr.mxu0 0.0
    %660 = vmatpush1.msra.mxu0 0.0
    %661 = vmatprep.subr.mxu0 0.0
    %662 = vmatpush1.msra.mxu0 0.0
    %663 = vmatprep.subr.mxu0 0.0
    %664 = vmatpush1.msra.mxu0 0.0
    %665 = vmatprep.subr.mxu0 0.0
    %666 = vmatpush1.msra.mxu0 0.0
    %667 = vmatprep.subr.mxu0 0.0
    %668 = vmatpush1.msra.mxu0 0.0
    %669 = vmatprep.subr.mxu0 0.0
    %670 = vmatpush1.msra.mxu0 0.0
    %671 = vmatprep.subr.mxu0 0.0
    %672 = vmatpush1.msra.mxu0 0.0
    %673 = vmatprep.subr.mxu0 0.0
    %674 = vmatpush1.msra.mxu0 0.0
    %675 = vmatprep.subr.mxu0 0.0
    %676 = vmatpush1.msra.mxu0 0.0
    %677 = vmatprep.subr.mxu0 0.0
    %678 = vmatpush1.msra.mxu0 0.0
    %679 = vmatprep.subr.mxu0 0.0
    %680 = vmatpush1.msra.mxu0 0.0
    %681 = vmatprep.subr.mxu0 0.0
    %682 = vmatpush1.msra.mxu0 0.0
    %683 = vmatprep.subr.mxu0 0.0
    %684 = vmatpush1.msra.mxu0 0.0
    %685 = vmatprep.subr.mxu0 0.0
    %686 = vmatpush1.msra.mxu0 %v197
    %687 = vmatprep.subr.mxu0 0.0
    %688 = vmatpush2.msra.mxu0 0.0
    %689 = vmatprep.subr.mxu0 0.0
    %690 = vmatpush2.msra.mxu0 0.0
    %691 = vmatprep.subr.mxu0 0.0
    %692 = vmatpush2.msra.mxu0 0.0
    %693 = vmatprep.subr.mxu0 0.0
    %694 = vmatpush2.msra.mxu0 0.0
    %695 = vmatprep.subr.mxu0 0.0
    %696 = vmatpush2.msra.mxu0 0.0
    %697 = vmatprep.subr.mxu0 0.0
    %698 = vmatpush2.msra.mxu0 0.0
    %699 = vmatprep.subr.mxu0 0.0
    %700 = vmatpush2.msra.mxu0 0.0
    %701 = vmatprep.subr.mxu0 0.0
    %702 = vmatpush2.msra.mxu0 0.0
    %703 = vmatprep.subr.mxu0 0.0
    %704 = vmatpush2.msra.mxu0 0.0
    %705 = vmatprep.subr.mxu0 0.0
    %706 = vmatpush2.msra.mxu0 0.0
    %707 = vmatprep.subr.mxu0 0.0
    %708 = vmatpush2.msra.mxu0 0.0
    %709 = vmatprep.subr.mxu0 0.0
    %710 = vmatpush2.msra.mxu0 0.0
    %711 = vmatprep.subr.mxu0 0.0
    %712 = vmatpush2.msra.mxu0 0.0
    %713 = vmatprep.subr.mxu0 0.0
    %714 = vmatpush2.msra.mxu0 0.0
    %715 = vmatprep.subr.mxu0 0.0
    %716 = vmatpush2.msra.mxu0 0.0
    %717 = vmatprep.subr.mxu0 0.0
    %718 = vmatpush2.msra.mxu0 0.0
    %719 = vmatprep.mubr.f32.mxu0 0.0
    %720 = vmatmul.mubr.f32.gmra.mxu0 %v653
    %v721 = vpop.f32.mrf.mxu0
    %v722 = vadd.f32 0.0, %v721
    %v723 = vpop.f32.mrf.mxu0
    %724 = vdwg.mxu0
    %v725 = vadd.f32 %v218, %v722
    %v726 = vxor.u32 %v725, 2147483648
    %v727 = vmul.f32 %v726, 1.442695
    %v728 = vpow.pop %v727
    %v729 = vadd.f32 %v728, 1.0
    %v730 = vrcp.pop %v729
    %v731 = vmul.f32 1.0, %v730
    %v732 = vtanh.pop %v725
    %v733 = vmul.f32 %v731, %v540
    %735 = vrot.lane.b32.xlu0 %v732, 112
    %v736 = vpop.permute.xlu0 %735
    %v738 = vmul.f32 %v731, %v736
    %740 = vrot.lane.b32.xlu0 %v738, 8
    %v741 = vpop.permute.xlu0 %740
    %v743 = vadd.f32 %v733, %v741
    %v744 = vtanh.pop %v743
    %746 = vrot.lane.b32.xlu0 %v744, 16
    %v747 = vpop.permute.xlu0 %746
    %v749 = vmul.f32 %v731, %v747
    %751 = vrot.lane.b32.xlu0 %v749, 104
    %v752 = vpop.permute.xlu0 %751
    %755 = vrot.lane.b32.xlu0 %v652, 112
    %v756 = vpop.permute.xlu0 %755
    %v758 = vsel %vm135, %v752, %v756
    %v760 = vsel %vm352, %v758, 0
    %762 = vmatprep.subr.mxu0 0.0
    %763 = vmatpush1.msra.mxu0 0.0
    %764 = vmatprep.subr.mxu0 0.0
    %765 = vmatpush1.msra.mxu0 0.0
    %766 = vmatprep.subr.mxu0 0.0
    %767 = vmatpush1.msra.mxu0 0.0
    %768 = vmatprep.subr.mxu0 0.0
    %769 = vmatpush1.msra.mxu0 0.0
    %770 = vmatprep.subr.mxu0 0.0
    %771 = vmatpush1.msra.mxu0 0.0
    %772 = vmatprep.subr.mxu0 0.0
    %773 = vmatpush1.msra.mxu0 0.0
    %774 = vmatprep.subr.mxu0 0.0
    %775 = vmatpush1.msra.mxu0 0.0
    %776 = vmatprep.subr.mxu0 0.0
    %777 = vmatpush1.msra.mxu0 0.0
    %778 = vmatprep.subr.mxu0 0.0
    %779 = vmatpush1.msra.mxu0 0.0
    %780 = vmatprep.subr.mxu0 0.0
    %781 = vmatpush1.msra.mxu0 0.0
    %782 = vmatprep.subr.mxu0 0.0
    %783 = vmatpush1.msra.mxu0 0.0
    %784 = vmatprep.subr.mxu0 0.0
    %785 = vmatpush1.msra.mxu0 0.0
    %786 = vmatprep.subr.mxu0 0.0
    %787 = vmatpush1.msra.mxu0 0.0
    %788 = vmatprep.subr.mxu0 0.0
    %789 = vmatpush1.msra.mxu0 0.0
    %790 = vmatprep.subr.mxu0 0.0
    %791 = vmatpush1.msra.mxu0 %v199
    %792 = vmatprep.subr.mxu0 0.0
    %793 = vmatpush1.msra.mxu0 %v198
    %794 = vmatprep.subr.mxu0 0.0
    %795 = vmatpush2.msra.mxu0 0.0
    %796 = vmatprep.subr.mxu0 0.0
    %797 = vmatpush2.msra.mxu0 0.0
    %798 = vmatprep.subr.mxu0 0.0
    %799 = vmatpush2.msra.mxu0 0.0
    %800 = vmatprep.subr.mxu0 0.0
    %801 = vmatpush2.msra.mxu0 0.0
    %802 = vmatprep.subr.mxu0 0.0
    %803 = vmatpush2.msra.mxu0 0.0
    %804 = vmatprep.subr.mxu0 0.0
    %805 = vmatpush2.msra.mxu0 0.0
    %806 = vmatprep.subr.mxu0 0.0
    %807 = vmatpush2.msra.mxu0 0.0
    %808 = vmatprep.subr.mxu0 0.0
    %809 = vmatpush2.msra.mxu0 0.0
    %810 = vmatprep.subr.mxu0 0.0
    %811 = vmatpush2.msra.mxu0 0.0
    %812 = vmatprep.subr.mxu0 0.0
    %813 = vmatpush2.msra.mxu0 0.0
    %814 = vmatprep.subr.mxu0 0.0
    %815 = vmatpush2.msra.mxu0 0.0
    %816 = vmatprep.subr.mxu0 0.0
    %817 = vmatpush2.msra.mxu0 0.0
    %818 = vmatprep.subr.mxu0 0.0
    %819 = vmatpush2.msra.mxu0 0.0
    %820 = vmatprep.subr.mxu0 0.0
    %821 = vmatpush2.msra.mxu0 0.0
    %822 = vmatprep.subr.mxu0 0.0
    %823 = vmatpush2.msra.mxu0 0.0
    %824 = vmatprep.subr.mxu0 0.0
    %825 = vmatpush2.msra.mxu0 0.0
    %826 = vmatprep.mubr.f32.mxu0 0.0
    %827 = vmatmul.mubr.f32.gmra.mxu0 %v760
    %v828 = vpop.f32.mrf.mxu0
    %v829 = vadd.f32 %v196, %v828
    %v830 = vpop.f32.mrf.mxu0
    %831 = vdwg.mxu0
    %v832 = vxor.u32 %v829, 2147483648
    %v833 = vmul.f32 %v832, 1.442695
    %v834 = vpow.pop %v833
    %v835 = vadd.f32 %v834, 1.0
    %v836 = vrcp.pop %v835
    %v837 = vmul.f32 1.0, %v836
    %v838 = vtanh.pop %v829
    %v839 = vmul.f32 %v837, %v646
    %841 = vrot.lane.b32.xlu0 %v838, 112
    %v842 = vpop.permute.xlu0 %841
    %v844 = vmul.f32 %v837, %v842
    %846 = vrot.lane.b32.xlu0 %v844, 8
    %v847 = vpop.permute.xlu0 %846
    %v849 = vadd.f32 %v839, %v847
    %v850 = vtanh.pop %v849
    %852 = vrot.lane.b32.xlu0 %v850, 16
    %v853 = vpop.permute.xlu0 %852
    %v855 = vmul.f32 %v837, %v853
    %v856 = vsel %vm135, %v752, 0
    %858 = vmatprep.subr.mxu0 0.0
    %859 = vmatpush1.msra.mxu0 0.0
    %860 = vmatprep.subr.mxu0 0.0
    %861 = vmatpush1.msra.mxu0 0.0
    %862 = vmatprep.subr.mxu0 0.0
    %863 = vmatpush1.msra.mxu0 0.0
    %864 = vmatprep.subr.mxu0 0.0
    %865 = vmatpush1.msra.mxu0 0.0
    %866 = vmatprep.subr.mxu0 0.0
    %867 = vmatpush1.msra.mxu0 0.0
    %868 = vmatprep.subr.mxu0 0.0
    %869 = vmatpush1.msra.mxu0 0.0
    %870 = vmatprep.subr.mxu0 0.0
    %871 = vmatpush1.msra.mxu0 0.0
    %872 = vmatprep.subr.mxu0 0.0
    %873 = vmatpush1.msra.mxu0 0.0
    %874 = vmatprep.subr.mxu0 0.0
    %875 = vmatpush1.msra.mxu0 0.0
    %876 = vmatprep.subr.mxu0 0.0
    %877 = vmatpush1.msra.mxu0 0.0
    %878 = vmatprep.subr.mxu0 0.0
    %879 = vmatpush1.msra.mxu0 0.0
    %880 = vmatprep.subr.mxu0 0.0
    %881 = vmatpush1.msra.mxu0 0.0
    %882 = vmatprep.subr.mxu0 0.0
    %883 = vmatpush1.msra.mxu0 0.0
    %884 = vmatprep.subr.mxu0 0.0
    %885 = vmatpush1.msra.mxu0 0.0
    %886 = vmatprep.subr.mxu0 0.0
    %887 = vmatpush1.msra.mxu0 0.0
    %888 = vmatprep.subr.mxu0 0.0
    %889 = vmatpush1.msra.mxu0 %v197
    %890 = vmatprep.subr.mxu0 0.0
    %891 = vmatpush2.msra.mxu0 0.0
    %892 = vmatprep.subr.mxu0 0.0
    %893 = vmatpush2.msra.mxu0 0.0
    %894 = vmatprep.subr.mxu0 0.0
    %895 = vmatpush2.msra.mxu0 0.0
    %896 = vmatprep.subr.mxu0 0.0
    %897 = vmatpush2.msra.mxu0 0.0
    %898 = vmatprep.subr.mxu0 0.0
    %899 = vmatpush2.msra.mxu0 0.0
    %900 = vmatprep.subr.mxu0 0.0
    %901 = vmatpush2.msra.mxu0 0.0
    %902 = vmatprep.subr.mxu0 0.0
    %903 = vmatpush2.msra.mxu0 0.0
    %904 = vmatprep.subr.mxu0 0.0
    %905 = vmatpush2.msra.mxu0 0.0
    %906 = vmatprep.subr.mxu0 0.0
    %907 = vmatpush2.msra.mxu0 0.0
    %908 = vmatprep.subr.mxu0 0.0
    %909 = vmatpush2.msra.mxu0 0.0
    %910 = vmatprep.subr.mxu0 0.0
    %911 = vmatpush2.msra.mxu0 0.0
    %912 = vmatprep.subr.mxu0 0.0
    %913 = vmatpush2.msra.mxu0 0.0
    %914 = vmatprep.subr.mxu0 0.0
    %915 = vmatpush2.msra.mxu0 0.0
    %916 = vmatprep.subr.mxu0 0.0
    %917 = vmatpush2.msra.mxu0 0.0
    %918 = vmatprep.subr.mxu0 0.0
    %919 = vmatpush2.msra.mxu0 0.0
    %920 = vmatprep.subr.mxu0 0.0
    %921 = vmatpush2.msra.mxu0 0.0
    %922 = vmatprep.mubr.f32.mxu0 0.0
    %923 = vmatmul.mubr.f32.gmra.mxu0 %v856
    %v924 = vpop.f32.mrf.mxu0
    %v925 = vadd.f32 0.0, %v924
    %v926 = vpop.f32.mrf.mxu0
    %927 = vdwg.mxu0
    %v928 = vadd.f32 %v224, %v925
    %v929 = vxor.u32 %v928, 2147483648
    %v930 = vmul.f32 %v929, 1.442695
    %v931 = vpow.pop %v930
    %v932 = vadd.f32 %v931, 1.0
    %v933 = vrcp.pop %v932
    %v934 = vmul.f32 1.0, %v933
    %v935 = vtanh.pop %v928
    %v936 = vmul.f32 %v934, %v743
    %938 = vrot.lane.b32.xlu0 %v935, 112
    %v939 = vpop.permute.xlu0 %938
    %v941 = vmul.f32 %v934, %v939
    %943 = vrot.lane.b32.xlu0 %v941, 8
    %v944 = vpop.permute.xlu0 %943
    %v946 = vadd.f32 %v936, %v944
    %v947 = vtanh.pop %v946
    %949 = vrot.lane.b32.xlu0 %v947, 16
    %v950 = vpop.permute.xlu0 %949
    %v952 = vmul.f32 %v934, %v950
    %954 = vrot.lane.b32.xlu0 %v952, 104
    %v955 = vpop.permute.xlu0 %954
    %958 = vrot.lane.b32.xlu0 %v855, 112
    %v959 = vpop.permute.xlu0 %958
    %v961 = vsel %vm135, %v955, %v959
    %v963 = vsel %vm352, %v961, 0
    %965 = vmatprep.subr.mxu0 0.0
    %966 = vmatpush1.msra.mxu0 0.0
    %967 = vmatprep.subr.mxu0 0.0
    %968 = vmatpush1.msra.mxu0 0.0
    %969 = vmatprep.subr.mxu0 0.0
    %970 = vmatpush1.msra.mxu0 0.0
    %971 = vmatprep.subr.mxu0 0.0
    %972 = vmatpush1.msra.mxu0 0.0
    %973 = vmatprep.subr.mxu0 0.0
    %974 = vmatpush1.msra.mxu0 0.0
    %975 = vmatprep.subr.mxu0 0.0
    %976 = vmatpush1.msra.mxu0 0.0
    %977 = vmatprep.subr.mxu0 0.0
    %978 = vmatpush1.msra.mxu0 0.0
    %979 = vmatprep.subr.mxu0 0.0
    %980 = vmatpush1.msra.mxu0 0.0
    %981 = vmatprep.subr.mxu0 0.0
    %982 = vmatpush1.msra.mxu0 0.0
    %983 = vmatprep.subr.mxu0 0.0
    %984 = vmatpush1.msra.mxu0 0.0
    %985 = vmatprep.subr.mxu0 0.0
    %986 = vmatpush1.msra.mxu0 0.0
    %987 = vmatprep.subr.mxu0 0.0
    %988 = vmatpush1.msra.mxu0 0.0
    %989 = vmatprep.subr.mxu0 0.0
    %990 = vmatpush1.msra.mxu0 0.0
    %991 = vmatprep.subr.mxu0 0.0
    %992 = vmatpush1.msra.mxu0 0.0
    %993 = vmatprep.subr.mxu0 0.0
    %994 = vmatpush1.msra.mxu0 %v199
    %995 = vmatprep.subr.mxu0 0.0
    %996 = vmatpush1.msra.mxu0 %v198
    %997 = vmatprep.subr.mxu0 0.0
    %998 = vmatpush2.msra.mxu0 0.0
    %999 = vmatprep.subr.mxu0 0.0
    %1000 = vmatpush2.msra.mxu0 0.0
    %1001 = vmatprep.subr.mxu0 0.0
    %1002 = vmatpush2.msra.mxu0 0.0
    %1003 = vmatprep.subr.mxu0 0.0
    %1004 = vmatpush2.msra.mxu0 0.0
    %1005 = vmatprep.subr.mxu0 0.0
    %1006 = vmatpush2.msra.mxu0 0.0
    %1007 = vmatprep.subr.mxu0 0.0
    %1008 = vmatpush2.msra.mxu0 0.0
    %1009 = vmatprep.subr.mxu0 0.0
    %1010 = vmatpush2.msra.mxu0 0.0
    %1011 = vmatprep.subr.mxu0 0.0
    %1012 = vmatpush2.msra.mxu0 0.0
    %1013 = vmatprep.subr.mxu0 0.0
    %1014 = vmatpush2.msra.mxu0 0.0
    %1015 = vmatprep.subr.mxu0 0.0
    %1016 = vmatpush2.msra.mxu0 0.0
    %1017 = vmatprep.subr.mxu0 0.0
    %1018 = vmatpush2.msra.mxu0 0.0
    %1019 = vmatprep.subr.mxu0 0.0
    %1020 = vmatpush2.msra.mxu0 0.0
    %1021 = vmatprep.subr.mxu0 0.0
    %1022 = vmatpush2.msra.mxu0 0.0
    %1023 = vmatprep.subr.mxu0 0.0
    %1024 = vmatpush2.msra.mxu0 0.0
    %1025 = vmatprep.subr.mxu0 0.0
    %1026 = vmatpush2.msra.mxu0 0.0
    %1027 = vmatprep.subr.mxu0 0.0
    %1028 = vmatpush2.msra.mxu0 0.0
    %1029 = vmatprep.mubr.f32.mxu0 0.0
    %1030 = vmatmul.mubr.f32.gmra.mxu0 %v963
    %v1031 = vpop.f32.mrf.mxu0
    %v1032 = vadd.f32 %v196, %v1031
    %v1033 = vpop.f32.mrf.mxu0
    %1034 = vdwg.mxu0
    %v1035 = vxor.u32 %v1032, 2147483648
    %v1036 = vmul.f32 %v1035, 1.442695
    %v1037 = vpow.pop %v1036
    %v1038 = vadd.f32 %v1037, 1.0
    %v1039 = vrcp.pop %v1038
    %v1040 = vmul.f32 1.0, %v1039
    %v1041 = vtanh.pop %v1032
    %v1042 = vmul.f32 %v1040, %v849
    %1044 = vrot.lane.b32.xlu0 %v1041, 112
    %v1045 = vpop.permute.xlu0 %1044
    %v1047 = vmul.f32 %v1040, %v1045
    %1049 = vrot.lane.b32.xlu0 %v1047, 8
    %v1050 = vpop.permute.xlu0 %1049
    %v1052 = vadd.f32 %v1042, %v1050
    %v1053 = vtanh.pop %v1052
    %1055 = vrot.lane.b32.xlu0 %v1053, 16
    %v1056 = vpop.permute.xlu0 %1055
    %v1058 = vmul.f32 %v1040, %v1056
    %v1059 = vsel %vm135, %v955, 0
    %1061 = vmatprep.subr.mxu0 0.0
    %1062 = vmatpush1.msra.mxu0 0.0
    %1063 = vmatprep.subr.mxu0 0.0
    %1064 = vmatpush1.msra.mxu0 0.0
    %1065 = vmatprep.subr.mxu0 0.0
    %1066 = vmatpush1.msra.mxu0 0.0
    %1067 = vmatprep.subr.mxu0 0.0
    %1068 = vmatpush1.msra.mxu0 0.0
    %1069 = vmatprep.subr.mxu0 0.0
    %1070 = vmatpush1.msra.mxu0 0.0
    %1071 = vmatprep.subr.mxu0 0.0
    %1072 = vmatpush1.msra.mxu0 0.0
    %1073 = vmatprep.subr.mxu0 0.0
    %1074 = vmatpush1.msra.mxu0 0.0
    %1075 = vmatprep.subr.mxu0 0.0
    %1076 = vmatpush1.msra.mxu0 0.0
    %1077 = vmatprep.subr.mxu0 0.0
    %1078 = vmatpush1.msra.mxu0 0.0
    %1079 = vmatprep.subr.mxu0 0.0
    %1080 = vmatpush1.msra.mxu0 0.0
    %1081 = vmatprep.subr.mxu0 0.0
    %1082 = vmatpush1.msra.mxu0 0.0
    %1083 = vmatprep.subr.mxu0 0.0
    %1084 = vmatpush1.msra.mxu0 0.0
    %1085 = vmatprep.subr.mxu0 0.0
    %1086 = vmatpush1.msra.mxu0 0.0
    %1087 = vmatprep.subr.mxu0 0.0
    %1088 = vmatpush1.msra.mxu0 0.0
    %1089 = vmatprep.subr.mxu0 0.0
    %1090 = vmatpush1.msra.mxu0 0.0
    %1091 = vmatprep.subr.mxu0 0.0
    %1092 = vmatpush1.msra.mxu0 %v197
    %1093 = vmatprep.subr.mxu0 0.0
    %1094 = vmatpush2.msra.mxu0 0.0
    %1095 = vmatprep.subr.mxu0 0.0
    %1096 = vmatpush2.msra.mxu0 0.0
    %1097 = vmatprep.subr.mxu0 0.0
    %1098 = vmatpush2.msra.mxu0 0.0
    %1099 = vmatprep.subr.mxu0 0.0
    %1100 = vmatpush2.msra.mxu0 0.0
    %1101 = vmatprep.subr.mxu0 0.0
    %1102 = vmatpush2.msra.mxu0 0.0
    %1103 = vmatprep.subr.mxu0 0.0
    %1104 = vmatpush2.msra.mxu0 0.0
    %1105 = vmatprep.subr.mxu0 0.0
    %1106 = vmatpush2.msra.mxu0 0.0
    %1107 = vmatprep.subr.mxu0 0.0
    %1108 = vmatpush2.msra.mxu0 0.0
    %1109 = vmatprep.subr.mxu0 0.0
    %1110 = vmatpush2.msra.mxu0 0.0
    %1111 = vmatprep.subr.mxu0 0.0
    %1112 = vmatpush2.msra.mxu0 0.0
    %1113 = vmatprep.subr.mxu0 0.0
    %1114 = vmatpush2.msra.mxu0 0.0
    %1115 = vmatprep.subr.mxu0 0.0
    %1116 = vmatpush2.msra.mxu0 0.0
    %1117 = vmatprep.subr.mxu0 0.0
    %1118 = vmatpush2.msra.mxu0 0.0
    %1119 = vmatprep.subr.mxu0 0.0
    %1120 = vmatpush2.msra.mxu0 0.0
    %1121 = vmatprep.subr.mxu0 0.0
    %1122 = vmatpush2.msra.mxu0 0.0
    %1123 = vmatprep.subr.mxu0 0.0
    %1124 = vmatpush2.msra.mxu0 0.0
    %1125 = vmatprep.mubr.f32.mxu0 0.0
    %1126 = vmatmul.mubr.f32.gmra.mxu0 %v1059
    %v1127 = vpop.f32.mrf.mxu0
    %v1128 = vadd.f32 0.0, %v1127
    %v1129 = vpop.f32.mrf.mxu0
    %1130 = vdwg.mxu0
    %v1131 = vadd.f32 %v230, %v1128
    %v1132 = vxor.u32 %v1131, 2147483648
    %v1133 = vmul.f32 %v1132, 1.442695
    %v1134 = vpow.pop %v1133
    %v1135 = vadd.f32 %v1134, 1.0
    %v1136 = vrcp.pop %v1135
    %v1137 = vmul.f32 1.0, %v1136
    %v1138 = vtanh.pop %v1131
    %v1139 = vmul.f32 %v1137, %v946
    %1141 = vrot.lane.b32.xlu0 %v1138, 112
    %v1142 = vpop.permute.xlu0 %1141
    %v1144 = vmul.f32 %v1137, %v1142
    %1146 = vrot.lane.b32.xlu0 %v1144, 8
    %v1147 = vpop.permute.xlu0 %1146
    %v1149 = vadd.f32 %v1139, %v1147
    %v1150 = vtanh.pop %v1149
    %1152 = vrot.lane.b32.xlu0 %v1150, 16
    %v1153 = vpop.permute.xlu0 %1152
    %v1155 = vmul.f32 %v1137, %v1153
    %1157 = vrot.lane.b32.xlu0 %v1155, 104
    %v1158 = vpop.permute.xlu0 %1157
    %1161 = vrot.lane.b32.xlu0 %v1058, 112
    %v1162 = vpop.permute.xlu0 %1161
    %v1164 = vsel %vm135, %v1158, %v1162
    %v1166 = vsel %vm352, %v1164, 0
    %1168 = vmatprep.subr.mxu0 0.0
    %1169 = vmatpush1.msra.mxu0 0.0
    %1170 = vmatprep.subr.mxu0 0.0
    %1171 = vmatpush1.msra.mxu0 0.0
    %1172 = vmatprep.subr.mxu0 0.0
    %1173 = vmatpush1.msra.mxu0 0.0
    %1174 = vmatprep.subr.mxu0 0.0
    %1175 = vmatpush1.msra.mxu0 0.0
    %1176 = vmatprep.subr.mxu0 0.0
    %1177 = vmatpush1.msra.mxu0 0.0
    %1178 = vmatprep.subr.mxu0 0.0
    %1179 = vmatpush1.msra.mxu0 0.0
    %1180 = vmatprep.subr.mxu0 0.0
    %1181 = vmatpush1.msra.mxu0 0.0
    %1182 = vmatprep.subr.mxu0 0.0
    %1183 = vmatpush1.msra.mxu0 0.0
    %1184 = vmatprep.subr.mxu0 0.0
    %1185 = vmatpush1.msra.mxu0 0.0
    %1186 = vmatprep.subr.mxu0 0.0
    %1187 = vmatpush1.msra.mxu0 0.0
    %1188 = vmatprep.subr.mxu0 0.0
    %1189 = vmatpush1.msra.mxu0 0.0
    %1190 = vmatprep.subr.mxu0 0.0
    %1191 = vmatpush1.msra.mxu0 0.0
    %1192 = vmatprep.subr.mxu0 0.0
    %1193 = vmatpush1.msra.mxu0 0.0
    %1194 = vmatprep.subr.mxu0 0.0
    %1195 = vmatpush1.msra.mxu0 0.0
    %1196 = vmatprep.subr.mxu0 0.0
    %1197 = vmatpush1.msra.mxu0 %v199
    %1198 = vmatprep.subr.mxu0 0.0
    %1199 = vmatpush1.msra.mxu0 %v198
    %1200 = vmatprep.subr.mxu0 0.0
    %1201 = vmatpush2.msra.mxu0 0.0
    %1202 = vmatprep.subr.mxu0 0.0
    %1203 = vmatpush2.msra.mxu0 0.0
    %1204 = vmatprep.subr.mxu0 0.0
    %1205 = vmatpush2.msra.mxu0 0.0
    %1206 = vmatprep.subr.mxu0 0.0
    %1207 = vmatpush2.msra.mxu0 0.0
    %1208 = vmatprep.subr.mxu0 0.0
    %1209 = vmatpush2.msra.mxu0 0.0
    %1210 = vmatprep.subr.mxu0 0.0
    %1211 = vmatpush2.msra.mxu0 0.0
    %1212 = vmatprep.subr.mxu0 0.0
    %1213 = vmatpush2.msra.mxu0 0.0
    %1214 = vmatprep.subr.mxu0 0.0
    %1215 = vmatpush2.msra.mxu0 0.0
    %1216 = vmatprep.subr.mxu0 0.0
    %1217 = vmatpush2.msra.mxu0 0.0
    %1218 = vmatprep.subr.mxu0 0.0
    %1219 = vmatpush2.msra.mxu0 0.0
    %1220 = vmatprep.subr.mxu0 0.0
    %1221 = vmatpush2.msra.mxu0 0.0
    %1222 = vmatprep.subr.mxu0 0.0
    %1223 = vmatpush2.msra.mxu0 0.0
    %1224 = vmatprep.subr.mxu0 0.0
    %1225 = vmatpush2.msra.mxu0 0.0
    %1226 = vmatprep.subr.mxu0 0.0
    %1227 = vmatpush2.msra.mxu0 0.0
    %1228 = vmatprep.subr.mxu0 0.0
    %1229 = vmatpush2.msra.mxu0 0.0
    %1230 = vmatprep.subr.mxu0 0.0
    %1231 = vmatpush2.msra.mxu0 0.0
    %1232 = vmatprep.mubr.f32.mxu0 0.0
    %1233 = vmatmul.mubr.f32.gmra.mxu0 %v1166
    %v1234 = vpop.f32.mrf.mxu0
    %v1235 = vadd.f32 %v196, %v1234
    %v1236 = vpop.f32.mrf.mxu0
    %1237 = vdwg.mxu0
    %v1238 = vxor.u32 %v1235, 2147483648
    %v1239 = vmul.f32 %v1238, 1.442695
    %v1240 = vpow.pop %v1239
    %v1241 = vadd.f32 %v1240, 1.0
    %v1242 = vrcp.pop %v1241
    %v1243 = vmul.f32 1.0, %v1242
    %v1244 = vtanh.pop %v1235
    %v1245 = vmul.f32 %v1243, %v1052
    %1247 = vrot.lane.b32.xlu0 %v1244, 112
    %v1248 = vpop.permute.xlu0 %1247
    %v1250 = vmul.f32 %v1243, %v1248
    %1252 = vrot.lane.b32.xlu0 %v1250, 8
    %v1253 = vpop.permute.xlu0 %1252
    %v1255 = vadd.f32 %v1245, %v1253
    %v1256 = vtanh.pop %v1255
    %1258 = vrot.lane.b32.xlu0 %v1256, 16
    %v1259 = vpop.permute.xlu0 %1258
    %v1261 = vmul.f32 %v1243, %v1259
    %v1262 = vsel %vm135, %v1158, 0
    %1264 = vmatprep.subr.mxu0 0.0
    %1265 = vmatpush1.msra.mxu0 0.0
    %1266 = vmatprep.subr.mxu0 0.0
    %1267 = vmatpush1.msra.mxu0 0.0
    %1268 = vmatprep.subr.mxu0 0.0
    %1269 = vmatpush1.msra.mxu0 0.0
    %1270 = vmatprep.subr.mxu0 0.0
    %1271 = vmatpush1.msra.mxu0 0.0
    %1272 = vmatprep.subr.mxu0 0.0
    %1273 = vmatpush1.msra.mxu0 0.0
    %1274 = vmatprep.subr.mxu0 0.0
    %1275 = vmatpush1.msra.mxu0 0.0
    %1276 = vmatprep.subr.mxu0 0.0
    %1277 = vmatpush1.msra.mxu0 0.0
    %1278 = vmatprep.subr.mxu0 0.0
    %1279 = vmatpush1.msra.mxu0 0.0
    %1280 = vmatprep.subr.mxu0 0.0
    %1281 = vmatpush1.msra.mxu0 0.0
    %1282 = vmatprep.subr.mxu0 0.0
    %1283 = vmatpush1.msra.mxu0 0.0
    %1284 = vmatprep.subr.mxu0 0.0
    %1285 = vmatpush1.msra.mxu0 0.0
    %1286 = vmatprep.subr.mxu0 0.0
    %1287 = vmatpush1.msra.mxu0 0.0
    %1288 = vmatprep.subr.mxu0 0.0
    %1289 = vmatpush1.msra.mxu0 0.0
    %1290 = vmatprep.subr.mxu0 0.0
    %1291 = vmatpush1.msra.mxu0 0.0
    %1292 = vmatprep.subr.mxu0 0.0
    %1293 = vmatpush1.msra.mxu0 0.0
    %1294 = vmatprep.subr.mxu0 0.0
    %1295 = vmatpush1.msra.mxu0 %v197
    %1296 = vmatprep.subr.mxu0 0.0
    %1297 = vmatpush2.msra.mxu0 0.0
    %1298 = vmatprep.subr.mxu0 0.0
    %1299 = vmatpush2.msra.mxu0 0.0
    %1300 = vmatprep.subr.mxu0 0.0
    %1301 = vmatpush2.msra.mxu0 0.0
    %1302 = vmatprep.subr.mxu0 0.0
    %1303 = vmatpush2.msra.mxu0 0.0
    %1304 = vmatprep.subr.mxu0 0.0
    %1305 = vmatpush2.msra.mxu0 0.0
    %1306 = vmatprep.subr.mxu0 0.0
    %1307 = vmatpush2.msra.mxu0 0.0
    %1308 = vmatprep.subr.mxu0 0.0
    %1309 = vmatpush2.msra.mxu0 0.0
    %1310 = vmatprep.subr.mxu0 0.0
    %1311 = vmatpush2.msra.mxu0 0.0
    %1312 = vmatprep.subr.mxu0 0.0
    %1313 = vmatpush2.msra.mxu0 0.0
    %1314 = vmatprep.subr.mxu0 0.0
    %1315 = vmatpush2.msra.mxu0 0.0
    %1316 = vmatprep.subr.mxu0 0.0
    %1317 = vmatpush2.msra.mxu0 0.0
    %1318 = vmatprep.subr.mxu0 0.0
    %1319 = vmatpush2.msra.mxu0 0.0
    %1320 = vmatprep.subr.mxu0 0.0
    %1321 = vmatpush2.msra.mxu0 0.0
    %1322 = vmatprep.subr.mxu0 0.0
    %1323 = vmatpush2.msra.mxu0 0.0
    %1324 = vmatprep.subr.mxu0 0.0
    %1325 = vmatpush2.msra.mxu0 0.0
    %1326 = vmatprep.subr.mxu0 0.0
    %1327 = vmatpush2.msra.mxu0 0.0
    %1328 = vmatprep.mubr.f32.mxu0 0.0
    %1329 = vmatmul.mubr.f32.gmra.mxu0 %v1262
    %v1330 = vpop.f32.mrf.mxu0
    %v1331 = vadd.f32 0.0, %v1330
    %v1332 = vpop.f32.mrf.mxu0
    %1333 = vdwg.mxu0
    %v1334 = vadd.f32 %v236, %v1331
    %v1335 = vxor.u32 %v1334, 2147483648
    %v1336 = vmul.f32 %v1335, 1.442695
    %v1337 = vpow.pop %v1336
    %v1338 = vadd.f32 %v1337, 1.0
    %v1339 = vrcp.pop %v1338
    %v1340 = vmul.f32 1.0, %v1339
    %v1341 = vtanh.pop %v1334
    %v1342 = vmul.f32 %v1340, %v1149
    %1344 = vrot.lane.b32.xlu0 %v1341, 112
    %v1345 = vpop.permute.xlu0 %1344
    %v1347 = vmul.f32 %v1340, %v1345
    %1349 = vrot.lane.b32.xlu0 %v1347, 8
    %v1350 = vpop.permute.xlu0 %1349
    %v1352 = vadd.f32 %v1342, %v1350
    %v1353 = vtanh.pop %v1352
    %1355 = vrot.lane.b32.xlu0 %v1353, 16
    %v1356 = vpop.permute.xlu0 %1355
    %v1358 = vmul.f32 %v1340, %v1356
    %1360 = vrot.lane.b32.xlu0 %v1358, 104
    %v1361 = vpop.permute.xlu0 %1360
    %1364 = vrot.lane.b32.xlu0 %v1261, 112
    %v1365 = vpop.permute.xlu0 %1364
    %v1367 = vsel %vm135, %v1361, %v1365
    %v1369 = vsel %vm352, %v1367, 0
    %1371 = vmatprep.subr.mxu0 0.0
    %1372 = vmatpush1.msra.mxu0 0.0
    %1373 = vmatprep.subr.mxu0 0.0
    %1374 = vmatpush1.msra.mxu0 0.0
    %1375 = vmatprep.subr.mxu0 0.0
    %1376 = vmatpush1.msra.mxu0 0.0
    %1377 = vmatprep.subr.mxu0 0.0
    %1378 = vmatpush1.msra.mxu0 0.0
    %1379 = vmatprep.subr.mxu0 0.0
    %1380 = vmatpush1.msra.mxu0 0.0
    %1381 = vmatprep.subr.mxu0 0.0
    %1382 = vmatpush1.msra.mxu0 0.0
    %1383 = vmatprep.subr.mxu0 0.0
    %1384 = vmatpush1.msra.mxu0 0.0
    %1385 = vmatprep.subr.mxu0 0.0
    %1386 = vmatpush1.msra.mxu0 0.0
    %1387 = vmatprep.subr.mxu0 0.0
    %1388 = vmatpush1.msra.mxu0 0.0
    %1389 = vmatprep.subr.mxu0 0.0
    %1390 = vmatpush1.msra.mxu0 0.0
    %1391 = vmatprep.subr.mxu0 0.0
    %1392 = vmatpush1.msra.mxu0 0.0
    %1393 = vmatprep.subr.mxu0 0.0
    %1394 = vmatpush1.msra.mxu0 0.0
    %1395 = vmatprep.subr.mxu0 0.0
    %1396 = vmatpush1.msra.mxu0 0.0
    %1397 = vmatprep.subr.mxu0 0.0
    %1398 = vmatpush1.msra.mxu0 0.0
    %1399 = vmatprep.subr.mxu0 0.0
    %1400 = vmatpush1.msra.mxu0 %v199
    %1401 = vmatprep.subr.mxu0 0.0
    %1402 = vmatpush1.msra.mxu0 %v198
    %1403 = vmatprep.subr.mxu0 0.0
    %1404 = vmatpush2.msra.mxu0 0.0
    %1405 = vmatprep.subr.mxu0 0.0
    %1406 = vmatpush2.msra.mxu0 0.0
    %1407 = vmatprep.subr.mxu0 0.0
    %1408 = vmatpush2.msra.mxu0 0.0
    %1409 = vmatprep.subr.mxu0 0.0
    %1410 = vmatpush2.msra.mxu0 0.0
    %1411 = vmatprep.subr.mxu0 0.0
    %1412 = vmatpush2.msra.mxu0 0.0
    %1413 = vmatprep.subr.mxu0 0.0
    %1414 = vmatpush2.msra.mxu0 0.0
    %1415 = vmatprep.subr.mxu0 0.0
    %1416 = vmatpush2.msra.mxu0 0.0
    %1417 = vmatprep.subr.mxu0 0.0
    %1418 = vmatpush2.msra.mxu0 0.0
    %1419 = vmatprep.subr.mxu0 0.0
    %1420 = vmatpush2.msra.mxu0 0.0
    %1421 = vmatprep.subr.mxu0 0.0
    %1422 = vmatpush2.msra.mxu0 0.0
    %1423 = vmatprep.subr.mxu0 0.0
    %1424 = vmatpush2.msra.mxu0 0.0
    %1425 = vmatprep.subr.mxu0 0.0
    %1426 = vmatpush2.msra.mxu0 0.0
    %1427 = vmatprep.subr.mxu0 0.0
    %1428 = vmatpush2.msra.mxu0 0.0
    %1429 = vmatprep.subr.mxu0 0.0
    %1430 = vmatpush2.msra.mxu0 0.0
    %1431 = vmatprep.subr.mxu0 0.0
    %1432 = vmatpush2.msra.mxu0 0.0
    %1433 = vmatprep.subr.mxu0 0.0
    %1434 = vmatpush2.msra.mxu0 0.0
    %1435 = vmatprep.mubr.f32.mxu0 0.0
    %1436 = vmatmul.mubr.f32.gmra.mxu0 %v1369
    %v1437 = vpop.f32.mrf.mxu0
    %v1438 = vadd.f32 %v196, %v1437
    %v1439 = vpop.f32.mrf.mxu0
    %1440 = vdwg.mxu0
    %v1441 = vxor.u32 %v1438, 2147483648
    %v1442 = vmul.f32 %v1441, 1.442695
    %v1443 = vpow.pop %v1442
    %v1444 = vadd.f32 %v1443, 1.0
    %v1445 = vrcp.pop %v1444
    %v1446 = vmul.f32 1.0, %v1445
    %v1447 = vtanh.pop %v1438
    %v1448 = vmul.f32 %v1446, %v1255
    %1450 = vrot.lane.b32.xlu0 %v1447, 112
    %v1451 = vpop.permute.xlu0 %1450
    %v1453 = vmul.f32 %v1446, %v1451
    %1455 = vrot.lane.b32.xlu0 %v1453, 8
    %v1456 = vpop.permute.xlu0 %1455
    %v1458 = vadd.f32 %v1448, %v1456
    %v1459 = vtanh.pop %v1458
    %1461 = vrot.lane.b32.xlu0 %v1459, 16
    %v1462 = vpop.permute.xlu0 %1461
    %v1464 = vmul.f32 %v1446, %v1462
    %v1465 = vsel %vm135, %v1361, 0
    %1467 = vmatprep.subr.mxu0 0.0
    %1468 = vmatpush1.msra.mxu0 0.0
    %1469 = vmatprep.subr.mxu0 0.0
    %1470 = vmatpush1.msra.mxu0 0.0
    %1471 = vmatprep.subr.mxu0 0.0
    %1472 = vmatpush1.msra.mxu0 0.0
    %1473 = vmatprep.subr.mxu0 0.0
    %1474 = vmatpush1.msra.mxu0 0.0
    %1475 = vmatprep.subr.mxu0 0.0
    %1476 = vmatpush1.msra.mxu0 0.0
    %1477 = vmatprep.subr.mxu0 0.0
    %1478 = vmatpush1.msra.mxu0 0.0
    %1479 = vmatprep.subr.mxu0 0.0
    %1480 = vmatpush1.msra.mxu0 0.0
    %1481 = vmatprep.subr.mxu0 0.0
    %1482 = vmatpush1.msra.mxu0 0.0
    %1483 = vmatprep.subr.mxu0 0.0
    %1484 = vmatpush1.msra.mxu0 0.0
    %1485 = vmatprep.subr.mxu0 0.0
    %1486 = vmatpush1.msra.mxu0 0.0
    %1487 = vmatprep.subr.mxu0 0.0
    %1488 = vmatpush1.msra.mxu0 0.0
    %1489 = vmatprep.subr.mxu0 0.0
    %1490 = vmatpush1.msra.mxu0 0.0
    %1491 = vmatprep.subr.mxu0 0.0
    %1492 = vmatpush1.msra.mxu0 0.0
    %1493 = vmatprep.subr.mxu0 0.0
    %1494 = vmatpush1.msra.mxu0 0.0
    %1495 = vmatprep.subr.mxu0 0.0
    %1496 = vmatpush1.msra.mxu0 0.0
    %1497 = vmatprep.subr.mxu0 0.0
    %1498 = vmatpush1.msra.mxu0 %v197
    %1499 = vmatprep.subr.mxu0 0.0
    %1500 = vmatpush2.msra.mxu0 0.0
    %1501 = vmatprep.subr.mxu0 0.0
    %1502 = vmatpush2.msra.mxu0 0.0
    %1503 = vmatprep.subr.mxu0 0.0
    %1504 = vmatpush2.msra.mxu0 0.0
    %1505 = vmatprep.subr.mxu0 0.0
    %1506 = vmatpush2.msra.mxu0 0.0
    %1507 = vmatprep.subr.mxu0 0.0
    %1508 = vmatpush2.msra.mxu0 0.0
    %1509 = vmatprep.subr.mxu0 0.0
    %1510 = vmatpush2.msra.mxu0 0.0
    %1511 = vmatprep.subr.mxu0 0.0
    %1512 = vmatpush2.msra.mxu0 0.0
    %1513 = vmatprep.subr.mxu0 0.0
    %1514 = vmatpush2.msra.mxu0 0.0
    %1515 = vmatprep.subr.mxu0 0.0
    %1516 = vmatpush2.msra.mxu0 0.0
    %1517 = vmatprep.subr.mxu0 0.0
    %1518 = vmatpush2.msra.mxu0 0.0
    %1519 = vmatprep.subr.mxu0 0.0
    %1520 = vmatpush2.msra.mxu0 0.0
    %1521 = vmatprep.subr.mxu0 0.0
    %1522 = vmatpush2.msra.mxu0 0.0
    %1523 = vmatprep.subr.mxu0 0.0
    %1524 = vmatpush2.msra.mxu0 0.0
    %1525 = vmatprep.subr.mxu0 0.0
    %1526 = vmatpush2.msra.mxu0 0.0
    %1527 = vmatprep.subr.mxu0 0.0
    %1528 = vmatpush2.msra.mxu0 0.0
    %1529 = vmatprep.subr.mxu0 0.0
    %1530 = vmatpush2.msra.mxu0 0.0
    %1531 = vmatprep.mubr.f32.mxu0 0.0
    %1532 = vmatmul.mubr.f32.gmra.mxu0 %v1465
    %v1533 = vpop.f32.mrf.mxu0
    %v1534 = vadd.f32 0.0, %v1533
    %v1535 = vpop.f32.mrf.mxu0
    %1536 = vdwg.mxu0
    %v1537 = vadd.f32 %v242, %v1534
    %v1538 = vxor.u32 %v1537, 2147483648
    %v1539 = vmul.f32 %v1538, 1.442695
    %v1540 = vpow.pop %v1539
    %v1541 = vadd.f32 %v1540, 1.0
    %v1542 = vrcp.pop %v1541
    %v1543 = vmul.f32 1.0, %v1542
    %v1544 = vtanh.pop %v1537
    %v1545 = vmul.f32 %v1543, %v1352
    %1547 = vrot.lane.b32.xlu0 %v1544, 112
    %v1548 = vpop.permute.xlu0 %1547
    %v1550 = vmul.f32 %v1543, %v1548
    %1552 = vrot.lane.b32.xlu0 %v1550, 8
    %v1553 = vpop.permute.xlu0 %1552
    %v1555 = vadd.f32 %v1545, %v1553
    %v1556 = vtanh.pop %v1555
    %1558 = vrot.lane.b32.xlu0 %v1556, 16
    %v1559 = vpop.permute.xlu0 %1558
    %v1561 = vmul.f32 %v1543, %v1559
    %1563 = vrot.lane.b32.xlu0 %v1561, 104
    %v1564 = vpop.permute.xlu0 %1563
    %1567 = vrot.lane.b32.xlu0 %v1464, 112
    %v1568 = vpop.permute.xlu0 %1567
    %v1570 = vsel %vm135, %v1564, %v1568
    %v1572 = vsel %vm352, %v1570, 0
    %1574 = vmatprep.subr.mxu0 0.0
    %1575 = vmatpush1.msra.mxu0 0.0
    %1576 = vmatprep.subr.mxu0 0.0
    %1577 = vmatpush1.msra.mxu0 0.0
    %1578 = vmatprep.subr.mxu0 0.0
    %1579 = vmatpush1.msra.mxu0 0.0
    %1580 = vmatprep.subr.mxu0 0.0
    %1581 = vmatpush1.msra.mxu0 0.0
    %1582 = vmatprep.subr.mxu0 0.0
    %1583 = vmatpush1.msra.mxu0 0.0
    %1584 = vmatprep.subr.mxu0 0.0
    %1585 = vmatpush1.msra.mxu0 0.0
    %1586 = vmatprep.subr.mxu0 0.0
    %1587 = vmatpush1.msra.mxu0 0.0
    %1588 = vmatprep.subr.mxu0 0.0
    %1589 = vmatpush1.msra.mxu0 0.0
    %1590 = vmatprep.subr.mxu0 0.0
    %1591 = vmatpush1.msra.mxu0 0.0
    %1592 = vmatprep.subr.mxu0 0.0
    %1593 = vmatpush1.msra.mxu0 0.0
    %1594 = vmatprep.subr.mxu0 0.0
    %1595 = vmatpush1.msra.mxu0 0.0
    %1596 = vmatprep.subr.mxu0 0.0
    %1597 = vmatpush1.msra.mxu0 0.0
    %1598 = vmatprep.subr.mxu0 0.0
    %1599 = vmatpush1.msra.mxu0 0.0
    %1600 = vmatprep.subr.mxu0 0.0
    %1601 = vmatpush1.msra.mxu0 0.0
    %1602 = vmatprep.subr.mxu0 0.0
    %1603 = vmatpush1.msra.mxu0 %v199
    %1604 = vmatprep.subr.mxu0 0.0
    %1605 = vmatpush1.msra.mxu0 %v198
    %1606 = vmatprep.subr.mxu0 0.0
    %1607 = vmatpush2.msra.mxu0 0.0
    %1608 = vmatprep.subr.mxu0 0.0
    %1609 = vmatpush2.msra.mxu0 0.0
    %1610 = vmatprep.subr.mxu0 0.0
    %1611 = vmatpush2.msra.mxu0 0.0
    %1612 = vmatprep.subr.mxu0 0.0
    %1613 = vmatpush2.msra.mxu0 0.0
    %1614 = vmatprep.subr.mxu0 0.0
    %1615 = vmatpush2.msra.mxu0 0.0
    %1616 = vmatprep.subr.mxu0 0.0
    %1617 = vmatpush2.msra.mxu0 0.0
    %1618 = vmatprep.subr.mxu0 0.0
    %1619 = vmatpush2.msra.mxu0 0.0
    %1620 = vmatprep.subr.mxu0 0.0
    %1621 = vmatpush2.msra.mxu0 0.0
    %1622 = vmatprep.subr.mxu0 0.0
    %1623 = vmatpush2.msra.mxu0 0.0
    %1624 = vmatprep.subr.mxu0 0.0
    %1625 = vmatpush2.msra.mxu0 0.0
    %1626 = vmatprep.subr.mxu0 0.0
    %1627 = vmatpush2.msra.mxu0 0.0
    %1628 = vmatprep.subr.mxu0 0.0
    %1629 = vmatpush2.msra.mxu0 0.0
    %1630 = vmatprep.subr.mxu0 0.0
    %1631 = vmatpush2.msra.mxu0 0.0
    %1632 = vmatprep.subr.mxu0 0.0
    %1633 = vmatpush2.msra.mxu0 0.0
    %1634 = vmatprep.subr.mxu0 0.0
    %1635 = vmatpush2.msra.mxu0 0.0
    %1636 = vmatprep.subr.mxu0 0.0
    %1637 = vmatpush2.msra.mxu0 0.0
    %1638 = vmatprep.mubr.f32.mxu0 0.0
    %1639 = vmatmul.mubr.f32.gmra.mxu0 %v1572
    %v1640 = vpop.f32.mrf.mxu0
    %v1641 = vadd.f32 %v196, %v1640
    %v1642 = vpop.f32.mrf.mxu0
    %1643 = vdwg.mxu0
    %v1644 = vxor.u32 %v1641, 2147483648
    %v1645 = vmul.f32 %v1644, 1.442695
    %v1646 = vpow.pop %v1645
    %v1647 = vadd.f32 %v1646, 1.0
    %v1648 = vrcp.pop %v1647
    %v1649 = vmul.f32 1.0, %v1648
    %v1650 = vtanh.pop %v1641
    %v1651 = vmul.f32 %v1649, %v1458
    %1653 = vrot.lane.b32.xlu0 %v1650, 112
    %v1654 = vpop.permute.xlu0 %1653
    %v1656 = vmul.f32 %v1649, %v1654
    %1658 = vrot.lane.b32.xlu0 %v1656, 8
    %v1659 = vpop.permute.xlu0 %1658
    %v1661 = vadd.f32 %v1651, %v1659
    %v1662 = vtanh.pop %v1661
    %1664 = vrot.lane.b32.xlu0 %v1662, 16
    %v1665 = vpop.permute.xlu0 %1664
    %v1667 = vmul.f32 %v1649, %v1665
    %v1668 = vsel %vm135, %v1564, 0
    %1670 = vmatprep.subr.mxu0 0.0
    %1671 = vmatpush1.msra.mxu0 0.0
    %1672 = vmatprep.subr.mxu0 0.0
    %1673 = vmatpush1.msra.mxu0 0.0
    %1674 = vmatprep.subr.mxu0 0.0
    %1675 = vmatpush1.msra.mxu0 0.0
    %1676 = vmatprep.subr.mxu0 0.0
    %1677 = vmatpush1.msra.mxu0 0.0
    %1678 = vmatprep.subr.mxu0 0.0
    %1679 = vmatpush1.msra.mxu0 0.0
    %1680 = vmatprep.subr.mxu0 0.0
    %1681 = vmatpush1.msra.mxu0 0.0
    %1682 = vmatprep.subr.mxu0 0.0
    %1683 = vmatpush1.msra.mxu0 0.0
    %1684 = vmatprep.subr.mxu0 0.0
    %1685 = vmatpush1.msra.mxu0 0.0
    %1686 = vmatprep.subr.mxu0 0.0
    %1687 = vmatpush1.msra.mxu0 0.0
    %1688 = vmatprep.subr.mxu0 0.0
    %1689 = vmatpush1.msra.mxu0 0.0
    %1690 = vmatprep.subr.mxu0 0.0
    %1691 = vmatpush1.msra.mxu0 0.0
    %1692 = vmatprep.subr.mxu0 0.0
    %1693 = vmatpush1.msra.mxu0 0.0
    %1694 = vmatprep.subr.mxu0 0.0
    %1695 = vmatpush1.msra.mxu0 0.0
    %1696 = vmatprep.subr.mxu0 0.0
    %1697 = vmatpush1.msra.mxu0 0.0
    %1698 = vmatprep.subr.mxu0 0.0
    %1699 = vmatpush1.msra.mxu0 0.0
    %1700 = vmatprep.subr.mxu0 0.0
    %1701 = vmatpush1.msra.mxu0 %v197
    %1702 = vmatprep.subr.mxu0 0.0
    %1703 = vmatpush2.msra.mxu0 0.0
    %1704 = vmatprep.subr.mxu0 0.0
    %1705 = vmatpush2.msra.mxu0 0.0
    %1706 = vmatprep.subr.mxu0 0.0
    %1707 = vmatpush2.msra.mxu0 0.0
    %1708 = vmatprep.subr.mxu0 0.0
    %1709 = vmatpush2.msra.mxu0 0.0
    %1710 = vmatprep.subr.mxu0 0.0
    %1711 = vmatpush2.msra.mxu0 0.0
    %1712 = vmatprep.subr.mxu0 0.0
    %1713 = vmatpush2.msra.mxu0 0.0
    %1714 = vmatprep.subr.mxu0 0.0
    %1715 = vmatpush2.msra.mxu0 0.0
    %1716 = vmatprep.subr.mxu0 0.0
    %1717 = vmatpush2.msra.mxu0 0.0
    %1718 = vmatprep.subr.mxu0 0.0
    %1719 = vmatpush2.msra.mxu0 0.0
    %1720 = vmatprep.subr.mxu0 0.0
    %1721 = vmatpush2.msra.mxu0 0.0
    %1722 = vmatprep.subr.mxu0 0.0
    %1723 = vmatpush2.msra.mxu0 0.0
    %1724 = vmatprep.subr.mxu0 0.0
    %1725 = vmatpush2.msra.mxu0 0.0
    %1726 = vmatprep.subr.mxu0 0.0
    %1727 = vmatpush2.msra.mxu0 0.0
    %1728 = vmatprep.subr.mxu0 0.0
    %1729 = vmatpush2.msra.mxu0 0.0
    %1730 = vmatprep.subr.mxu0 0.0
    %1731 = vmatpush2.msra.mxu0 0.0
    %1732 = vmatprep.subr.mxu0 0.0
    %1733 = vmatpush2.msra.mxu0 0.0
    %1734 = vmatprep.mubr.f32.mxu0 0.0
    %1735 = vmatmul.mubr.f32.gmra.mxu0 %v1668
    %v1736 = vpop.f32.mrf.mxu0
    %v1737 = vadd.f32 0.0, %v1736
    %v1738 = vpop.f32.mrf.mxu0
    %1739 = vdwg.mxu0
    %v1740 = vadd.f32 %v248, %v1737
    %v1741 = vxor.u32 %v1740, 2147483648
    %v1742 = vmul.f32 %v1741, 1.442695
    %v1743 = vpow.pop %v1742
    %v1744 = vadd.f32 %v1743, 1.0
    %v1745 = vrcp.pop %v1744
    %v1746 = vmul.f32 1.0, %v1745
    %v1747 = vtanh.pop %v1740
    %v1748 = vmul.f32 %v1746, %v1555
    %1750 = vrot.lane.b32.xlu0 %v1747, 112
    %v1751 = vpop.permute.xlu0 %1750
    %v1753 = vmul.f32 %v1746, %v1751
    %1755 = vrot.lane.b32.xlu0 %v1753, 8
    %v1756 = vpop.permute.xlu0 %1755
    %v1758 = vadd.f32 %v1748, %v1756
    %v1759 = vtanh.pop %v1758
    %1761 = vrot.lane.b32.xlu0 %v1759, 16
    %v1762 = vpop.permute.xlu0 %1761
    %v1764 = vmul.f32 %v1746, %v1762
    %1766 = vrot.lane.b32.xlu0 %v1764, 104
    %v1767 = vpop.permute.xlu0 %1766
    %1770 = vrot.lane.b32.xlu0 %v1667, 112
    %v1771 = vpop.permute.xlu0 %1770
    %v1773 = vsel %vm135, %v1767, %v1771
    %v1775 = vsel %vm352, %v1773, 0
    %1777 = vmatprep.subr.mxu0 0.0
    %1778 = vmatpush1.msra.mxu0 0.0
    %1779 = vmatprep.subr.mxu0 0.0
    %1780 = vmatpush1.msra.mxu0 0.0
    %1781 = vmatprep.subr.mxu0 0.0
    %1782 = vmatpush1.msra.mxu0 0.0
    %1783 = vmatprep.subr.mxu0 0.0
    %1784 = vmatpush1.msra.mxu0 0.0
    %1785 = vmatprep.subr.mxu0 0.0
    %1786 = vmatpush1.msra.mxu0 0.0
    %1787 = vmatprep.subr.mxu0 0.0
    %1788 = vmatpush1.msra.mxu0 0.0
    %1789 = vmatprep.subr.mxu0 0.0
    %1790 = vmatpush1.msra.mxu0 0.0
    %1791 = vmatprep.subr.mxu0 0.0
    %1792 = vmatpush1.msra.mxu0 0.0
    %1793 = vmatprep.subr.mxu0 0.0
    %1794 = vmatpush1.msra.mxu0 0.0
    %1795 = vmatprep.subr.mxu0 0.0
    %1796 = vmatpush1.msra.mxu0 0.0
    %1797 = vmatprep.subr.mxu0 0.0
    %1798 = vmatpush1.msra.mxu0 0.0
    %1799 = vmatprep.subr.mxu0 0.0
    %1800 = vmatpush1.msra.mxu0 0.0
    %1801 = vmatprep.subr.mxu0 0.0
    %1802 = vmatpush1.msra.mxu0 0.0
    %1803 = vmatprep.subr.mxu0 0.0
    %1804 = vmatpush1.msra.mxu0 0.0
    %1805 = vmatprep.subr.mxu0 0.0
    %1806 = vmatpush1.msra.mxu0 %v199
    %1807 = vmatprep.subr.mxu0 0.0
    %1808 = vmatpush1.msra.mxu0 %v198
    %1809 = vmatprep.subr.mxu0 0.0
    %1810 = vmatpush2.msra.mxu0 0.0
    %1811 = vmatprep.subr.mxu0 0.0
    %1812 = vmatpush2.msra.mxu0 0.0
    %1813 = vmatprep.subr.mxu0 0.0
    %1814 = vmatpush2.msra.mxu0 0.0
    %1815 = vmatprep.subr.mxu0 0.0
    %1816 = vmatpush2.msra.mxu0 0.0
    %1817 = vmatprep.subr.mxu0 0.0
    %1818 = vmatpush2.msra.mxu0 0.0
    %1819 = vmatprep.subr.mxu0 0.0
    %1820 = vmatpush2.msra.mxu0 0.0
    %1821 = vmatprep.subr.mxu0 0.0
    %1822 = vmatpush2.msra.mxu0 0.0
    %1823 = vmatprep.subr.mxu0 0.0
    %1824 = vmatpush2.msra.mxu0 0.0
    %1825 = vmatprep.subr.mxu0 0.0
    %1826 = vmatpush2.msra.mxu0 0.0
    %1827 = vmatprep.subr.mxu0 0.0
    %1828 = vmatpush2.msra.mxu0 0.0
    %1829 = vmatprep.subr.mxu0 0.0
    %1830 = vmatpush2.msra.mxu0 0.0
    %1831 = vmatprep.subr.mxu0 0.0
    %1832 = vmatpush2.msra.mxu0 0.0
    %1833 = vmatprep.subr.mxu0 0.0
    %1834 = vmatpush2.msra.mxu0 0.0
    %1835 = vmatprep.subr.mxu0 0.0
    %1836 = vmatpush2.msra.mxu0 0.0
    %1837 = vmatprep.subr.mxu0 0.0
    %1838 = vmatpush2.msra.mxu0 0.0
    %1839 = vmatprep.subr.mxu0 0.0
    %1840 = vmatpush2.msra.mxu0 0.0
    %1841 = vmatprep.mubr.f32.mxu0 0.0
    %1842 = vmatmul.mubr.f32.gmra.mxu0 %v1775
    %v1843 = vpop.f32.mrf.mxu0
    %v1844 = vadd.f32 %v196, %v1843
    %v1845 = vpop.f32.mrf.mxu0
    %1846 = vdwg.mxu0
    %v1847 = vxor.u32 %v1844, 2147483648
    %v1848 = vmul.f32 %v1847, 1.442695
    %v1849 = vpow.pop %v1848
    %v1850 = vadd.f32 %v1849, 1.0
    %v1851 = vrcp.pop %v1850
    %v1852 = vmul.f32 1.0, %v1851
    %v1853 = vtanh.pop %v1844
    %v1854 = vmul.f32 %v1852, %v1661
    %1856 = vrot.lane.b32.xlu0 %v1853, 112
    %v1857 = vpop.permute.xlu0 %1856
    %v1859 = vmul.f32 %v1852, %v1857
    %1861 = vrot.lane.b32.xlu0 %v1859, 8
    %v1862 = vpop.permute.xlu0 %1861
    %v1864 = vadd.f32 %v1854, %v1862
    %v1865 = vtanh.pop %v1864
    %1867 = vrot.lane.b32.xlu0 %v1865, 16
    %v1868 = vpop.permute.xlu0 %1867
    %v1870 = vmul.f32 %v1852, %v1868
    %v1871 = vlaneseq
    %v1872 = vshrl.u32 %v1871, 7
    %v1873 = vsub.s32 0, %v1872
    %v1874 = vrot.slane %v1870, %v1873
    %1876 = vrot.lane.b32.xlu0 %v1874, 108
    %v1877 = vpop.permute.xlu0 %1876
    %vm1879 = vcmask 31744
    %v1880 = vsel %vm1879, %v15, %v1877
    %vm1881 = vcmask 97280
    %1882 = vst.msk [vmem:[#allocation3] sm:$0xff] %vm1881, %v1880
    // Predicated region
    $region14: #{tpu_custom_call.1} parent=1 // pred_check
      _
    $region15: #{tpu_custom_call.1} parent=1 // pred_check_branch
      %1884 = sbr.rel (0) target = $region17
    $region16: #{tpu_custom_call.1} parent=1 // pred_region
      %s1886 = ssub.s32 128, 128
      %1887 = vsyncadd [#allocation4], %s1886
      %s1889 = sshll.u32 [#allocation3], 4
      %s1890 = int_to_ptr.vmem [resolvable:$true] %s1889
      %1892 = dma.vmem_to_hbm [thread:$0]  %s1890, 128, %s3, [#allocation4]
    $region17: #{tpu_custom_call.1} parent=1 // pred_fallthru
      _
    // Predicated region
    $region18: #{tpu_custom_call.1} parent=1 // pred_check
      _
    $region19: #{tpu_custom_call.1} parent=1 // pred_check_branch
      %1894 = sbr.rel (0) target = $region21
    $region20: #{tpu_custom_call.1} parent=1 // pred_region
      %1895 = dma.done [#allocation4], 128
    $region21: #{tpu_custom_call.1} parent=1 // pred_fallthru
      _
    %1896 = vsyncpa [#allocation4], 1

</llo_original>
